<compile_context>
chip_gen: v7x
topology: tpu7x:2x2x1
jax: 0.10.0
libtpu: 0.0.40
codegen_flags: <defaults>
</compile_context>

<pallas_src>
import functools

import numpy as np
import jax
import jax.numpy as jnp
from jax.experimental import pallas as pl
from jax.experimental.pallas import tpu as pltpu

NUM_CLASSES = 10
CODEBOOK_SIZE = 16     # p
NUM_EMBEDDINGS = 64    # d  (z_e1 has 1024 = 16 * 64 features -> 16 codewords/sample)
BN_EPS = 1e-5


@functools.lru_cache(maxsize=1)
def _is_v7x():
    """True on TPU v7x (2 TensorCores, no int8 MXU)."""
    try:
        kind = jax.devices()[0].device_kind.lower()
        return ("v7" in kind) or ("tpu7" in kind)
    except Exception:  # pragma: no cover
        return False


# ----------------------------------------------------------------------------
# Fused matmul kernel:  out = act((A @ B) * scale + shift) [- mean(out)]
# B may be given as (K, N) or pre-transposed (N, K) [lane-dense classifier
# weight]; int8 B is dequantized in-kernel (scale folded into `scale`).
# ----------------------------------------------------------------------------
def _matmul_kernel(a_ref, b_ref, scale_ref, shift_ref, o_ref, acc_ref, *,
                   act, sub_mean, b_nk):
    k = pl.program_id(1)

    @pl.when(k == 0)
    def _():
        acc_ref[...] = jnp.zeros_like(acc_ref)

    b = b_ref[...]
    if b.dtype == jnp.int8:
        # weight-only int8: VPU dequant (via f32) so the MXU always sees bf16;
        # the per-channel dequant scale is folded into the epilogue `scale`.
        b = b.astype(jnp.float32).astype(jnp.bfloat16)

    if b_nk:   # b tile is (tn, tk): contract on its second dim (trans_b)
        acc_ref[...] += jax.lax.dot_general(
            a_ref[...], b, (((1,), (1,)), ((), ())),
            preferred_element_type=jnp.float32)
    else:      # b tile is (tk, tn)
        acc_ref[...] += jnp.dot(a_ref[...], b,
                                preferred_element_type=jnp.float32)

    @pl.when(k == pl.num_programs(1) - 1)
    def _():
        y = acc_ref[...] * scale_ref[...] + shift_ref[...]
        if act == "sigmoid":
            y = jax.nn.sigmoid(y)
        elif act == "relu":
            y = jnp.maximum(y, 0.0)
        if sub_mean:
            # PyTorch normalize(): mean over the ENTIRE tensor (mixes batch),
            # so a single global mean over the resident output tile is exact.
            y = y - jnp.mean(y)
        o_ref[...] = y.astype(o_ref.dtype)


def pallas_matmul(a, b, scale=None, shift=None, act=None, sub_mean=False,
                  tk=None, tn=None, b_nk=False, out_dtype=jnp.float32):
    """act((a @ b) * scale + shift), optionally minus its global mean.

    a: (M, K).  b: (K, N), or (N, K) if b_nk=True (contracted on dim 1).
    A is cast to bf16; B may be bf16 or int8 (dequant in kernel); f32 MXU acc.
    scale/shift broadcast over rows (BN fold / bias / int8 dequant scale).
    tk: K tile (None -> single K block), tn: N tile (None -> full N).
    """
    M, K = a.shape
    if b_nk:
        N, K2 = b.shape
    else:
        K2, N = b.shape
    assert K == K2

    if a.dtype != jnp.bfloat16:
        a = a.astype(jnp.bfloat16)
    if b.dtype not in (jnp.bfloat16, jnp.int8):
        b = b.astype(jnp.bfloat16)

    scale = (jnp.ones((1, N), jnp.float32) if scale is None
             else scale.reshape(1, N).astype(jnp.float32))
    shift = (jnp.zeros((1, N), jnp.float32) if shift is None
             else shift.reshape(1, N).astype(jnp.float32))

    # --- K tiling (zero-pad after the casts so padded rows stay exact)
    if tk is None or tk >= K:
        tk = ((K + 7) // 8) * 8
        nk = 1
    else:
        nk = (K + tk - 1) // tk
    Kp = nk * tk
    if Kp != K:
        a = jnp.pad(a, ((0, 0), (0, Kp - K)))
        if b_nk:
            b = jnp.pad(b, ((0, 0), (0, Kp - K)))
        else:
            b = jnp.pad(b, ((0, Kp - K), (0, 0)))

    # --- N tiling (output / weight channel tile, "parallel" grid axis)
    if tn is None or tn >= N:
        tn, nn = N, 1
    else:
        assert N % tn == 0
        nn = N // tn
    if sub_mean:
        assert nn == 1, "global-mean fusion needs the full output resident"

    if b_nk:
        b_spec = pl.BlockSpec((tn, tk), lambda n, k: (n, k))
    else:
        b_spec = pl.BlockSpec((tk, tn), lambda n, k: (k, n))

    return pl.pallas_call(
        functools.partial(_matmul_kernel, act=act, sub_mean=sub_mean, b_nk=b_nk),
        out_shape=jax.ShapeDtypeStruct((M, N), out_dtype),
        grid=(nn, nk),
        in_specs=[
            pl.BlockSpec((M, tk), lambda n, k: (0, k)),
            b_spec,
            pl.BlockSpec((1, tn), lambda n, k: (0, n)),
            pl.BlockSpec((1, tn), lambda n, k: (0, n)),
        ],
        out_specs=pl.BlockSpec((M, tn), lambda n, k: (0, n)),
        scratch_shapes=[pltpu.VMEM((M, tn), jnp.float32)],
        compiler_params=pltpu.CompilerParams(
            dimension_semantics=("parallel", "arbitrary")),
    )(a, b, scale, shift)


# ----------------------------------------------------------------------------
# 3x3 conv (padding=1, optional stride) as ONE deep-K im2col matmul + BN + ReLU
# ----------------------------------------------------------------------------
def _im2col_3x3(x_nhwc, stride):
    B, H, W, C = x_nhwc.shape
    Ho = (H + 2 - 3) // stride + 1
    Wo = (W + 2 - 3) // stride + 1
    xp = jnp.pad(x_nhwc, ((0, 0), (1, 1), (1, 1), (0, 0)))
    cols = []
    for kh in range(3):
        for kw in range(3):
            cols.append(xp[:, kh:kh + (Ho - 1) * stride + 1:stride,
                           kw:kw + (Wo - 1) * stride + 1:stride, :])
    patches = jnp.concatenate(cols, axis=-1)            # (B, Ho, Wo, 9*C)
    return patches.reshape(B * Ho * Wo, 9 * C), Ho, Wo


def conv3x3_bn_relu(x_nhwc, w_hwio, scale=None, shift=None, stride=1,
                    relu=True, tn=None, out_dtype=jnp.float32):
    B, _, _, Cin = x_nhwc.shape
    Cout = w_hwio.shape[-1]
    a, Ho, Wo = _im2col_3x3(x_nhwc, stride)             # single (M, 9*Cin) slab
    wk = w_hwio.reshape(9 * Cin, Cout)                  # matches (kh, kw, cin) order
    out = pallas_matmul(a, wk, scale=scale, shift=shift,
                        act="relu" if relu else None, tn=tn, out_dtype=out_dtype)
    return out.reshape(B, Ho, Wo, Cout)


# ----------------------------------------------------------------------------
# Vector quantizer: one kernel computes the distance matrix once and the
# masked first-occurrence argmin for every active-codeword count.
# ----------------------------------------------------------------------------
def _vq_argmin_kernel(x_ref, cb_ref, cb2_ref, *idx_refs, n_acts):
    x = x_ref[...]                                      # (M, d)
    cb = cb_ref[...]                                    # (P, d)
    x2 = jnp.sum(x * x, axis=1, keepdims=True)          # (M, 1)
    xc = jax.lax.dot_general(x, cb, (((1,), (1,)), ((), ())),
                             preferred_element_type=jnp.float32)   # (M, P)
    dist = x2 + cb2_ref[...] - 2.0 * xc
    P = cb.shape[0]
    col = jax.lax.broadcasted_iota(jnp.int32, dist.shape, 1)
    for s, n_act in enumerate(n_acts):
        d = jnp.where(col < n_act, dist, jnp.float32(1e30))   # first 2^(s+1) codewords
        dmin = jnp.min(d, axis=1, keepdims=True)
        cand = jnp.where(d <= dmin, col, jnp.int32(P))
        idx = jnp.min(cand, axis=1).astype(jnp.int32)          # first-occurrence argmin
        idx_refs[s][...] = idx[:, None]


def vq_argmin_all(flat, codebook, n_acts):
    Mf = flat.shape[0]
    P = codebook.shape[0]
    cb2 = jnp.sum(codebook * codebook, axis=1).reshape(1, P)
    out_shapes = tuple(jax.ShapeDtypeStruct((Mf, 1), jnp.int32) for _ in n_acts)
    return pl.pallas_call(
        functools.partial(_vq_argmin_kernel, n_acts=tuple(n_acts)),
        out_shape=out_shapes,
    )(flat.astype(jnp.float32), codebook.astype(jnp.float32), cb2)


# ----------------------------------------------------------------------------
# Glue helpers (plain JAX)
# ----------------------------------------------------------------------------
def _interp_matrix(n_in, n_out):
    """align_corners=True bilinear interpolation matrix (UpsamplingBilinear2d)."""
    R = np.zeros((n_out, n_in), dtype=np.float32)
    for o in range(n_out):
        src = 0.0 if n_out == 1 else o * (n_in - 1) / (n_out - 1)
        i0 = int(np.floor(src))
        i1 = min(i0 + 1, n_in - 1)
        w = src - i0
        R[o, i0] += 1.0 - w
        R[o, i1] += w
    return jnp.asarray(R)


def upsample_bilinear2x(x_nhwc):
    # Tiny fixed interpolation (4->8, 8->16); kept in plain jnp: a Pallas call
    # per (2H, H) @ (H, B*W*C) matmul is pure launch overhead. Preserves dtype.
    B, H, W, C = x_nhwc.shape
    Rh = _interp_matrix(H, 2 * H).astype(x_nhwc.dtype)
    Rw = _interp_matrix(W, 2 * W).astype(x_nhwc.dtype)
    y = jnp.einsum("oh,bhwc->bowc", Rh, x_nhwc)
    y = jnp.einsum("pw,bowc->bopc", Rw, y)
    return y


def simulate_channel(codebook, correct_p, key):
    """Reproduces the per-codeword random transmission (jax.random)."""
    P = codebook.shape[0]
    u = jax.random.uniform(key, (P,), jnp.float32)
    i = jnp.arange(P)
    shift = jnp.floor((u - correct_p) / ((1.0 - correct_p) / P)).astype(jnp.int32)
    src = jnp.where(u <= correct_p, i, (i + 1 + shift) % P)
    # transmitted_encodings[:, i] = encodings[:, src[i]]
    #   =>  quantized = onehot(idx) @ T @ codebook  with T the column permutation
    T = (src[None, :] == i[:, None]).astype(jnp.float32)     # (P, P)
    return T @ codebook                                      # effective codebook


# ----------------------------------------------------------------------------
# Parameters (deterministic, synthetic; matmul weights stored bf16 / int8)
# ----------------------------------------------------------------------------
def init_params(key, quantize_linear):
    ks = jax.random.split(key, 14)

    def nrm(k, shape, scale, dtype=jnp.bfloat16):
        return (scale * jax.random.normal(k, shape, jnp.float32)).astype(dtype)

    # nn.Linear(8192, 1024): optionally weight-only int8 (per-output-channel
    # symmetric); the dequant scale rides the matmul epilogue `scale` operand.
    lin_w_f32 = (1.0 / np.sqrt(8192)) * jax.random.normal(
        ks[1], (8192, 1024), jnp.float32)
    if quantize_linear:
        absmax = jnp.maximum(jnp.max(jnp.abs(lin_w_f32), axis=0, keepdims=True),
                             1e-8)
        lin_w_scale = (absmax / 127.0).reshape(-1)                  # (1024,)
        lin_w_i8 = jnp.clip(jnp.round(lin_w_f32 / absmax * 127.0),
                            -127, 127).astype(jnp.int8)
        lin = dict(lin_w_i8=lin_w_i8, lin_w_scale=lin_w_scale)
    else:
        lin = dict(lin_w=lin_w_f32.astype(jnp.bfloat16))

    params = dict(
        enc_w=nrm(ks[0], (3, 3, 3, 32), 0.1),                       # encoder stub
        lin_b=nrm(ks[2], (1024,), 0.01, jnp.float32),
        codebook=jax.random.uniform(ks[3], (CODEBOOK_SIZE, NUM_EMBEDDINGS),
                                    jnp.float32,
                                    -1.0 / CODEBOOK_SIZE, 1.0 / CODEBOOK_SIZE),
        l1_w=nrm(ks[4], (3, 3, 64, 32), 0.1),                        # layer1 conv
        l1_gamma=1.0 + 0.1 * jax.random.normal(ks[5], (32,), jnp.float32),
        l1_beta=0.1 * jax.random.normal(ks[6], (32,), jnp.float32),
        l2_w=nrm(ks[7], (3, 3, 32, 32), 0.1),                        # layer2 conv
        l2_gamma=1.0 + 0.1 * jax.random.normal(ks[8], (32,), jnp.float32),
        l2_beta=0.1 * jax.random.normal(ks[9], (32,), jnp.float32),
        dec_w=nrm(ks[10], (3, 3, 32, 1280), 0.05),                   # decoder stub
        # Classifier weight stored PRE-TRANSPOSED (10, 81920) and with its K
        # rows in NHWC-flatten order of the decoder features (weights are
        # synthetic, so the permutation is done "offline" here for free).
        cls_w=nrm(ks[11], (NUM_CLASSES, 1280 * 8 * 8), 1.0 / np.sqrt(81920)),
        cls_b=nrm(ks[12], (NUM_CLASSES,), 0.01, jnp.float32),
    )
    params.update(lin)
    return params


# ----------------------------------------------------------------------------
# AdapCB_Model.forward
# ----------------------------------------------------------------------------
def adapcb_forward(params, inputs_nchw, num_active, prev_vecs, correct_p, key):
    del prev_vecs  # only used by training-mode losses (eval branch here)
    B = inputs_nchw.shape[0]
    v7 = _is_v7x()

    # ---- encoder (MobileNetV2[0:6] stub) -> z_e : (B, 32, 16, 16), f32 output
    x_nhwc = jnp.transpose(inputs_nchw, (0, 2, 3, 1))
    z_e_nhwc = conv3x3_bn_relu(x_nhwc, params["enc_w"], stride=2, relu=True)
    z_e = jnp.transpose(z_e_nhwc, (0, 3, 1, 2))                    # NCHW, returned

    # ---- Linear(8192 -> 1024) + Sigmoid + normalize
    xflat = z_e.reshape(B, 32 * 16 * 16)
    if "lin_w_i8" in params:
        lin_w, lin_scale = params["lin_w_i8"], params["lin_w_scale"]
    else:
        lin_w, lin_scale = params["lin_w"], None
    if v7:
        # 2 TensorCores: parallel N axis (tn=512); global mean moves to a
        # trivial follow-up op over the (B, 1024) output.
        z_raw = pallas_matmul(xflat, lin_w, scale=lin_scale, shift=params["lin_b"],
                              act="sigmoid", sub_mean=False, tk=2048, tn=512)
        z_e1 = z_raw - jnp.mean(z_raw)
    else:
        # single TC: keep the global-mean subtraction fused in the epilogue.
        z_e1 = pallas_matmul(xflat, lin_w, scale=lin_scale, shift=params["lin_b"],
                             act="sigmoid", sub_mean=True, tk=2048)   # (B, 1024)

    # ---- AdaptiveVectorQuantizer (eval-mode semantics): one kernel, all stages
    cb = params["codebook"]
    flat = z_e1.reshape(-1, NUM_EMBEDDINGS)                        # (B*16, 64)
    n_stages = int(np.log2(num_active))
    n_acts = [2 ** (s + 1) for s in range(n_stages)]
    idx_list = vq_argmin_all(flat, cb, n_acts)                     # tuple of (B*16, 1)

    z_q_rows, vq_loss = [], []
    for s in range(n_stages):
        key, sub = jax.random.split(key)
        cb_eff = simulate_channel(cb, correct_p, sub)              # noisy channel
        quant = jnp.take(cb_eff, idx_list[s][:, 0], axis=0)        # (B*16, 64)
        z_q_rows.append(quant.reshape(z_e1.shape))
        vq_loss.append(0.0)                                        # eval: cb_loss = 0
    actives = cb[:num_active]

    # ---- decode ALL quantization levels in one batched pass (SB = n_stages*B)
    SB = n_stages * B
    z_q_all = jnp.concatenate(z_q_rows, axis=0)                    # (SB, 1024)
    x1 = jnp.transpose(z_q_all.reshape(SB, 64, 4, 4), (0, 2, 3, 1))    # NHWC

    # NOTE: BN fold uses running_mean=0 / running_var=1 (stub statistics);
    # with real pretrained BN the shift must become beta - gamma*mean/sqrt(var+eps).
    l1_scale = params["l1_gamma"] / jnp.sqrt(1.0 + BN_EPS)
    l2_scale = params["l2_gamma"] / jnp.sqrt(1.0 + BN_EPS)

    x1 = conv3x3_bn_relu(x1, params["l1_w"], l1_scale, params["l1_beta"],
                         out_dtype=jnp.bfloat16)                           # (SB,4,4,32)
    x1 = upsample_bilinear2x(x1)                                           # (SB,8,8,32)
    x1 = conv3x3_bn_relu(x1, params["l2_w"], l2_scale, params["l2_beta"],
                         out_dtype=jnp.bfloat16)                           # (SB,8,8,32)
    x1 = upsample_bilinear2x(x1)                                           # (SB,16,16,32)

    # decoder (MobileNetV2[6:] stub) -> (SB, 8, 8, 1280) bf16
    dec_tn = 640 if v7 else None          # v7x: one Cout half per TensorCore
    feat = conv3x3_bn_relu(x1, params["dec_w"], stride=2, relu=True,
                           tn=dec_tn, out_dtype=jnp.bfloat16)
    # Flatten NHWC directly (no transpose); cls_w rows were generated in the
    # matching order at init.
    feat = feat.reshape(SB, 1280 * 8 * 8)                          # (SB, 81920)

    # classifier: Dropout (identity, eval) + Linear(81920 -> 10)
    # cls_w is (10, 81920) -> lane-dense K, contracted via trans_b; 2 K steps.
    preds_all = pallas_matmul(feat, params["cls_w"], shift=params["cls_b"],
                              act=None, b_nk=True, tk=40960)       # (SB, 10)
    preds_list = [preds_all[s * B:(s + 1) * B] for s in range(n_stages)]

    return preds_list, vq_loss, actives, z_e


# ----------------------------------------------------------------------------
if __name__ == "__main__":
    key = jax.random.PRNGKey(0)
    k_x, k_p, k_ch = jax.random.split(key, 3)

    inputs = jax.random.normal(k_x, (2, 3, 32, 32), jnp.float32)   # small NCHW input
    params = init_params(k_p, quantize_linear=not _is_v7x())

    preds_list, vq_loss, actives, z_e = adapcb_forward(
        params, inputs, num_active=4, prev_vecs=None, correct_p=0.9, key=k_ch)

    for p_ in preds_list:
        jax.block_until_ready(p_)
    jax.block_until_ready(z_e)

    assert len(preds_list) == 2
    assert preds_list[0].shape == (2, NUM_CLASSES)
    assert z_e.shape == (2, 32, 16, 16)
    assert actives.shape == (4, NUM_EMBEDDINGS)
    print("KERNEL_OK")
</pallas_src>

<mosaic_0001>
module attributes {stable_mosaic.version = 11 : i64} {
  func.func @_matmul_kernel(%arg0: i32, %arg1: i32, %arg2: memref<512x32xbf16, #tpu.memory_space<vmem>>, %arg3: memref<32x32xbf16, #tpu.memory_space<vmem>>, %arg4: memref<1x32xf32, #tpu.memory_space<vmem>>, %arg5: memref<1x32xf32, #tpu.memory_space<vmem>>, %arg6: memref<512x32xf32, #tpu.memory_space<vmem>>, %arg7: memref<512x32xf32, #tpu.memory_space<vmem>>) attributes {dimension_semantics = [#tpu.dimension_semantics<parallel>, #tpu.dimension_semantics<arbitrary>], iteration_bounds = array<i64: 1, 1>, scalar_prefetch = 0 : i64, scratch_operands = 1 : i64, tpu.core_type = #tpu.core_type<tc>, window_params = [{transform_indices = @transform_0, window_bounds = array<i64: 512, 32>}, {transform_indices = @transform_1, window_bounds = array<i64: 32, 32>}, {transform_indices = @transform_2, window_bounds = array<i64: 1, 32>}, {transform_indices = @transform_3, window_bounds = array<i64: 1, 32>}, {transform_indices = @transform_4, window_bounds = array<i64: 512, 32>}]} {
    %c0_i32 = arith.constant 0 : i32
    %0 = arith.cmpi eq, %arg1, %c0_i32 : i32
    %1 = arith.extui %0 : i1 to i32
    %c0_i32_0 = arith.constant 0 : i32
    %2 = arith.cmpi ne, %1, %c0_i32_0 : i32
    scf.if %2 {
      %cst_10 = arith.constant 0.000000e+00 : f32
      %12 = vector.broadcast %cst_10 : f32 to vector<512x32xf32>
      %c0_11 = arith.constant 0 : index
      %c0_12 = arith.constant 0 : index
      %13 = vector.load %arg7[%c0_11, %c0_12] : memref<512x32xf32, #tpu.memory_space<vmem>>, vector<512x32xf32>
      tpu.vector_store %arg7[%c0_11, %c0_12], %12 {strides = array<i32>} : memref<512x32xf32, #tpu.memory_space<vmem>>, vector<512x32xf32>,
    } else {
    }
    %c0 = arith.constant 0 : index
    %c0_1 = arith.constant 0 : index
    %3 = vector.load %arg3[%c0, %c0_1] : memref<32x32xbf16, #tpu.memory_space<vmem>>, vector<32x32xbf16>
    %c0_2 = arith.constant 0 : index
    %c0_3 = arith.constant 0 : index
    %4 = vector.load %arg7[%c0_2, %c0_3] : memref<512x32xf32, #tpu.memory_space<vmem>>, vector<512x32xf32>
    %c0_4 = arith.constant 0 : index
    %c0_5 = arith.constant 0 : index
    %5 = vector.load %arg2[%c0_4, %c0_5] : memref<512x32xbf16, #tpu.memory_space<vmem>>, vector<512x32xbf16>
    %cst = arith.constant dense<0.000000e+00> : vector<512x32xf32>
    %6 = tpu.matmul %5, %3, %cst {dimension_numbers = #tpu.dot_dimension_numbers<[1], [0], [0], [1], [0, 0, 1, 1], [], []>} : vector<512x32xbf16>, vector<32x32xbf16>, vector<512x32xf32> -> vector<512x32xf32>
    %7 = arith.addf %4, %6 : vector<512x32xf32>
    %c0_6 = arith.constant 0 : index
    %c0_7 = arith.constant 0 : index
    %8 = vector.load %arg7[%c0_6, %c0_7] : memref<512x32xf32, #tpu.memory_space<vmem>>, vector<512x32xf32>
    tpu.vector_store %arg7[%c0_6, %c0_7], %7 {strides = array<i32>} : memref<512x32xf32, #tpu.memory_space<vmem>>, vector<512x32xf32>,
    %c0_i32_8 = arith.constant 0 : i32
    %9 = arith.cmpi eq, %arg1, %c0_i32_8 : i32
    %10 = arith.extui %9 : i1 to i32
    %c0_i32_9 = arith.constant 0 : i32
    %11 = arith.cmpi ne, %10, %c0_i32_9 : i32
    scf.if %11 {
      %c0_10 = arith.constant 0 : index
      %c0_11 = arith.constant 0 : index
      %12 = vector.load %arg7[%c0_10, %c0_11] : memref<512x32xf32, #tpu.memory_space<vmem>>, vector<512x32xf32>
      %c0_12 = arith.constant 0 : index
      %c0_13 = arith.constant 0 : index
      %13 = vector.load %arg4[%c0_12, %c0_13] : memref<1x32xf32, #tpu.memory_space<vmem>>, vector<1x32xf32>
      %14 = vector.broadcast %13 : vector<1x32xf32> to vector<512x32xf32>
      %15 = arith.mulf %12, %14 : vector<512x32xf32>
      %c0_14 = arith.constant 0 : index
      %c0_15 = arith.constant 0 : index
      %16 = vector.load %arg5[%c0_14, %c0_15] : memref<1x32xf32, #tpu.memory_space<vmem>>, vector<1x32xf32>
      %17 = vector.broadcast %16 : vector<1x32xf32> to vector<512x32xf32>
      %18 = arith.addf %15, %17 : vector<512x32xf32>
      %cst_16 = arith.constant 0.000000e+00 : f32
      %19 = vector.broadcast %cst_16 : f32 to vector<512x32xf32>
      %20 = arith.maximumf %18, %19 : vector<512x32xf32>
      %c0_17 = arith.constant 0 : index
      %c0_18 = arith.constant 0 : index
      %21 = vector.load %arg6[%c0_17, %c0_18] : memref<512x32xf32, #tpu.memory_space<vmem>>, vector<512x32xf32>
      tpu.vector_store %arg6[%c0_17, %c0_18], %20 {strides = array<i32>} : memref<512x32xf32, #tpu.memory_space<vmem>>, vector<512x32xf32>,
    } else {
    }
    return
  }
  func.func @transform_0(%arg0: i32, %arg1: i32) -> (i32, i32) {
    %c0_i32 = arith.constant 0 : i32
    %c0_i32_0 = arith.constant 0 : i32
    return %c0_i32, %arg1 : i32, i32
  }
  func.func @transform_1(%arg0: i32, %arg1: i32) -> (i32, i32) {
    %c0_i32 = arith.constant 0 : i32
    return %arg1, %arg0 : i32, i32
  }
  func.func @transform_2(%arg0: i32, %arg1: i32) -> (i32, i32) {
    %c0_i32 = arith.constant 0 : i32
    %c0_i32_0 = arith.constant 0 : i32
    return %c0_i32, %arg0 : i32, i32
  }
  func.func @transform_3(%arg0: i32, %arg1: i32) -> (i32, i32) {
    %c0_i32 = arith.constant 0 : i32
    %c0_i32_0 = arith.constant 0 : i32
    return %c0_i32, %arg0 : i32, i32
  }
  func.func @transform_4(%arg0: i32, %arg1: i32) -> (i32, i32) {
    %c0_i32 = arith.constant 0 : i32
    %c0_i32_0 = arith.constant 0 : i32
    return %c0_i32, %arg0 : i32, i32
  }
}

</mosaic_0001>

<llo_original>
// kernel: tpu_custom_call.1
$region0: #{tpu_custom_call.1}
  #allocation0 [shape = 'u32[]', space=smem, size = 0x4, offset = 0x4, fixed_abs, tag = 'smem constant byte address 0x4 - core index']
  #allocation1 [shape = 'u32[144,128]{1,0:T(1,128)}', space=vmem, size = 0x12000, scoped, tag = 'internal scratch']
  #allocation2 [shape = 'f32[512,32]{1,0:T(8,128)}', space=vmem, size = 0x40000, scoped, tag = 'scratch operand']
  %s0 = inlined_call_operand.vmem [shape: bf16[512,32], index: 0, kind: input, shape index: {}]
  %s1 = inlined_call_operand.vmem [shape: bf16[32,32], index: 1, kind: input, shape index: {}]
  %s2 = inlined_call_operand.vmem [shape: f32[1,32], index: 2, kind: input, shape index: {}]
  %s3 = inlined_call_operand.vmem [shape: f32[1,32], index: 3, kind: input, shape index: {}]
  %s4 = inlined_call_operand.vmem [shape: f32[512,32], index: 4, kind: output, shape index: {}]
  %s5 = sld [smem:[#allocation0]]
  $region34: #{tpu_custom_call.1} parent=0
    _
  %s7 = ssub.s32 1, %s5
  %s8 = scalar_select 0, %s7, %s5
  // Predicated region
  $region2: #{tpu_custom_call.1} parent=0 // pred_check
    _
  $region3: #{tpu_custom_call.1} parent=0 // pred_check_branch
    %10 = sbr.rel (0) target = $region5
  $region4: #{tpu_custom_call.1} parent=0 // pred_region
    _
  $region5: #{tpu_custom_call.1} parent=0 // pred_fallthru
    _
  // Predicated region
  $region6: #{tpu_custom_call.1} parent=0 // pred_check
    _
  $region7: #{tpu_custom_call.1} parent=0 // pred_check_branch
    %12 = sbr.rel (0) target = $region9
  $region8: #{tpu_custom_call.1} parent=0 // pred_region
    _
  $region9: #{tpu_custom_call.1} parent=0 // pred_fallthru
    _
  // Predicated region
  $region10: #{tpu_custom_call.1} parent=0 // pred_check
    _
  $region11: #{tpu_custom_call.1} parent=0 // pred_check_branch
    %14 = sbr.rel (0) target = $region13
  $region12: #{tpu_custom_call.1} parent=0 // pred_region
    _
  $region13: #{tpu_custom_call.1} parent=0 // pred_fallthru
    _
  // Predicated region
  $region14: #{tpu_custom_call.1} parent=0 // pred_check
    _
  $region15: #{tpu_custom_call.1} parent=0 // pred_check_branch
    %16 = sbr.rel (0) target = $region17
  $region16: #{tpu_custom_call.1} parent=0 // pred_region
    _
  $region17: #{tpu_custom_call.1} parent=0 // pred_fallthru
    _
  %p18 = scmp.eq.s32.totalorder 0, 0
  // Predicated region
  $region18: #{tpu_custom_call.1} parent=0 // pred_check
    %p19 = pneg %p18
  $region19: #{tpu_custom_call.1} parent=0 // pred_check_branch
    %21 = sbr.rel (%p19) target = $region21
  $region20: #{tpu_custom_call.1} parent=0 // pred_region
    %vm22 = vcmask 261120
    %23 = vst.msk [vmem:[#allocation2] sm:$0xff] %vm22, 0.0
    %24 = vst.msk [vmem:[#allocation2 + $0x8] sm:$0xff] %vm22, 0.0
    %25 = vst.msk [vmem:[#allocation2 + $0x10] sm:$0xff] %vm22, 0.0
    %26 = vst.msk [vmem:[#allocation2 + $0x18] sm:$0xff] %vm22, 0.0
    %27 = vst.msk [vmem:[#allocation2 + $0x20] sm:$0xff] %vm22, 0.0
    %28 = vst.msk [vmem:[#allocation2 + $0x28] sm:$0xff] %vm22, 0.0
    %29 = vst.msk [vmem:[#allocation2 + $0x30] sm:$0xff] %vm22, 0.0
    %30 = vst.msk [vmem:[#allocation2 + $0x38] sm:$0xff] %vm22, 0.0
    %31 = vst.msk [vmem:[#allocation2 + $0x40] sm:$0xff] %vm22, 0.0
    %32 = vst.msk [vmem:[#allocation2 + $0x48] sm:$0xff] %vm22, 0.0
    %33 = vst.msk [vmem:[#allocation2 + $0x50] sm:$0xff] %vm22, 0.0
    %34 = vst.msk [vmem:[#allocation2 + $0x58] sm:$0xff] %vm22, 0.0
    %35 = vst.msk [vmem:[#allocation2 + $0x60] sm:$0xff] %vm22, 0.0
    %36 = vst.msk [vmem:[#allocation2 + $0x68] sm:$0xff] %vm22, 0.0
    %37 = vst.msk [vmem:[#allocation2 + $0x70] sm:$0xff] %vm22, 0.0
    %38 = vst.msk [vmem:[#allocation2 + $0x78] sm:$0xff] %vm22, 0.0
    %39 = vst.msk [vmem:[#allocation2 + $0x80] sm:$0xff] %vm22, 0.0
    %40 = vst.msk [vmem:[#allocation2 + $0x88] sm:$0xff] %vm22, 0.0
    %41 = vst.msk [vmem:[#allocation2 + $0x90] sm:$0xff] %vm22, 0.0
    %42 = vst.msk [vmem:[#allocation2 + $0x98] sm:$0xff] %vm22, 0.0
    %43 = vst.msk [vmem:[#allocation2 + $0xa0] sm:$0xff] %vm22, 0.0
    %44 = vst.msk [vmem:[#allocation2 + $0xa8] sm:$0xff] %vm22, 0.0
    %45 = vst.msk [vmem:[#allocation2 + $0xb0] sm:$0xff] %vm22, 0.0
    %46 = vst.msk [vmem:[#allocation2 + $0xb8] sm:$0xff] %vm22, 0.0
    %47 = vst.msk [vmem:[#allocation2 + $0xc0] sm:$0xff] %vm22, 0.0
    %48 = vst.msk [vmem:[#allocation2 + $0xc8] sm:$0xff] %vm22, 0.0
    %49 = vst.msk [vmem:[#allocation2 + $0xd0] sm:$0xff] %vm22, 0.0
    %50 = vst.msk [vmem:[#allocation2 + $0xd8] sm:$0xff] %vm22, 0.0
    %51 = vst.msk [vmem:[#allocation2 + $0xe0] sm:$0xff] %vm22, 0.0
    %52 = vst.msk [vmem:[#allocation2 + $0xe8] sm:$0xff] %vm22, 0.0
    %53 = vst.msk [vmem:[#allocation2 + $0xf0] sm:$0xff] %vm22, 0.0
    %54 = vst.msk [vmem:[#allocation2 + $0xf8] sm:$0xff] %vm22, 0.0
    %55 = vst.msk [vmem:[#allocation2 + $0x100] sm:$0xff] %vm22, 0.0
    %56 = vst.msk [vmem:[#allocation2 + $0x108] sm:$0xff] %vm22, 0.0
    %57 = vst.msk [vmem:[#allocation2 + $0x110] sm:$0xff] %vm22, 0.0
    %58 = vst.msk [vmem:[#allocation2 + $0x118] sm:$0xff] %vm22, 0.0
    %59 = vst.msk [vmem:[#allocation2 + $0x120] sm:$0xff] %vm22, 0.0
    %60 = vst.msk [vmem:[#allocation2 + $0x128] sm:$0xff] %vm22, 0.0
    %61 = vst.msk [vmem:[#allocation2 + $0x130] sm:$0xff] %vm22, 0.0
    %62 = vst.msk [vmem:[#allocation2 + $0x138] sm:$0xff] %vm22, 0.0
    %63 = vst.msk [vmem:[#allocation2 + $0x140] sm:$0xff] %vm22, 0.0
    %64 = vst.msk [vmem:[#allocation2 + $0x148] sm:$0xff] %vm22, 0.0
    %65 = vst.msk [vmem:[#allocation2 + $0x150] sm:$0xff] %vm22, 0.0
    %66 = vst.msk [vmem:[#allocation2 + $0x158] sm:$0xff] %vm22, 0.0
    %67 = vst.msk [vmem:[#allocation2 + $0x160] sm:$0xff] %vm22, 0.0
    %68 = vst.msk [vmem:[#allocation2 + $0x168] sm:$0xff] %vm22, 0.0
    %69 = vst.msk [vmem:[#allocation2 + $0x170] sm:$0xff] %vm22, 0.0
    %70 = vst.msk [vmem:[#allocation2 + $0x178] sm:$0xff] %vm22, 0.0
    %71 = vst.msk [vmem:[#allocation2 + $0x180] sm:$0xff] %vm22, 0.0
    %72 = vst.msk [vmem:[#allocation2 + $0x188] sm:$0xff] %vm22, 0.0
    %73 = vst.msk [vmem:[#allocation2 + $0x190] sm:$0xff] %vm22, 0.0
    %74 = vst.msk [vmem:[#allocation2 + $0x198] sm:$0xff] %vm22, 0.0
    %75 = vst.msk [vmem:[#allocation2 + $0x1a0] sm:$0xff] %vm22, 0.0
    %76 = vst.msk [vmem:[#allocation2 + $0x1a8] sm:$0xff] %vm22, 0.0
    %77 = vst.msk [vmem:[#allocation2 + $0x1b0] sm:$0xff] %vm22, 0.0
    %78 = vst.msk [vmem:[#allocation2 + $0x1b8] sm:$0xff] %vm22, 0.0
    %79 = vst.msk [vmem:[#allocation2 + $0x1c0] sm:$0xff] %vm22, 0.0
    %80 = vst.msk [vmem:[#allocation2 + $0x1c8] sm:$0xff] %vm22, 0.0
    %81 = vst.msk [vmem:[#allocation2 + $0x1d0] sm:$0xff] %vm22, 0.0
    %82 = vst.msk [vmem:[#allocation2 + $0x1d8] sm:$0xff] %vm22, 0.0
    %83 = vst.msk [vmem:[#allocation2 + $0x1e0] sm:$0xff] %vm22, 0.0
    %84 = vst.msk [vmem:[#allocation2 + $0x1e8] sm:$0xff] %vm22, 0.0
    %85 = vst.msk [vmem:[#allocation2 + $0x1f0] sm:$0xff] %vm22, 0.0
    %86 = vst.msk [vmem:[#allocation2 + $0x1f8] sm:$0xff] %vm22, 0.0
  $region21: #{tpu_custom_call.1} parent=0 // pred_fallthru
    _
  %v87 = vld [vmem:[%s1] sm:$0xf]
  %v88 = vld [vmem:[%s1 + $0x4] sm:$0xf]
  %v89 = vld [vmem:[%s1 + $0x8] sm:$0xf]
  %v90 = vld [vmem:[%s1 + $0xc] sm:$0xf]
  %v91 = vld [vmem:[#allocation2] sm:$0xff]
  %v92 = vld [vmem:[#allocation2 + $0x8] sm:$0xff]
  %v93 = vld [vmem:[#allocation2 + $0x10] sm:$0xff]
  %v94 = vld [vmem:[#allocation2 + $0x18] sm:$0xff]
  %v95 = vld [vmem:[#allocation2 + $0x20] sm:$0xff]
  %v96 = vld [vmem:[#allocation2 + $0x28] sm:$0xff]
  %v97 = vld [vmem:[#allocation2 + $0x30] sm:$0xff]
  %v98 = vld [vmem:[#allocation2 + $0x38] sm:$0xff]
  %v99 = vld [vmem:[#allocation2 + $0x40] sm:$0xff]
  %v100 = vld [vmem:[#allocation2 + $0x48] sm:$0xff]
  %v101 = vld [vmem:[#allocation2 + $0x50] sm:$0xff]
  %v102 = vld [vmem:[#allocation2 + $0x58] sm:$0xff]
  %v103 = vld [vmem:[#allocation2 + $0x60] sm:$0xff]
  %v104 = vld [vmem:[#allocation2 + $0x68] sm:$0xff]
  %v105 = vld [vmem:[#allocation2 + $0x70] sm:$0xff]
  %v106 = vld [vmem:[#allocation2 + $0x78] sm:$0xff]
  %v107 = vld [vmem:[#allocation2 + $0x80] sm:$0xff]
  %v108 = vld [vmem:[#allocation2 + $0x88] sm:$0xff]
  %v109 = vld [vmem:[#allocation2 + $0x90] sm:$0xff]
  %v110 = vld [vmem:[#allocation2 + $0x98] sm:$0xff]
  %v111 = vld [vmem:[#allocation2 + $0xa0] sm:$0xff]
  %v112 = vld [vmem:[#allocation2 + $0xa8] sm:$0xff]
  %v113 = vld [vmem:[#allocation2 + $0xb0] sm:$0xff]
  %v114 = vld [vmem:[#allocation2 + $0xb8] sm:$0xff]
  %v115 = vld [vmem:[#allocation2 + $0xc0] sm:$0xff]
  %v116 = vld [vmem:[#allocation2 + $0xc8] sm:$0xff]
  %v117 = vld [vmem:[#allocation2 + $0xd0] sm:$0xff]
  %v118 = vld [vmem:[#allocation2 + $0xd8] sm:$0xff]
  %v119 = vld [vmem:[#allocation2 + $0xe0] sm:$0xff]
  %v120 = vld [vmem:[#allocation2 + $0xe8] sm:$0xff]
  %v121 = vld [vmem:[#allocation2 + $0xf0] sm:$0xff]
  %v122 = vld [vmem:[#allocation2 + $0xf8] sm:$0xff]
  %v123 = vld [vmem:[#allocation2 + $0x100] sm:$0xff]
  %v124 = vld [vmem:[#allocation2 + $0x108] sm:$0xff]
  %v125 = vld [vmem:[#allocation2 + $0x110] sm:$0xff]
  %v126 = vld [vmem:[#allocation2 + $0x118] sm:$0xff]
  %v127 = vld [vmem:[#allocation2 + $0x120] sm:$0xff]
  %v128 = vld [vmem:[#allocation2 + $0x128] sm:$0xff]
  %v129 = vld [vmem:[#allocation2 + $0x130] sm:$0xff]
  %v130 = vld [vmem:[#allocation2 + $0x138] sm:$0xff]
  %v131 = vld [vmem:[#allocation2 + $0x140] sm:$0xff]
  %v132 = vld [vmem:[#allocation2 + $0x148] sm:$0xff]
  %v133 = vld [vmem:[#allocation2 + $0x150] sm:$0xff]
  %v134 = vld [vmem:[#allocation2 + $0x158] sm:$0xff]
  %v135 = vld [vmem:[#allocation2 + $0x160] sm:$0xff]
  %v136 = vld [vmem:[#allocation2 + $0x168] sm:$0xff]
  %v137 = vld [vmem:[#allocation2 + $0x170] sm:$0xff]
  %v138 = vld [vmem:[#allocation2 + $0x178] sm:$0xff]
  %v139 = vld [vmem:[#allocation2 + $0x180] sm:$0xff]
  %v140 = vld [vmem:[#allocation2 + $0x188] sm:$0xff]
  %v141 = vld [vmem:[#allocation2 + $0x190] sm:$0xff]
  %v142 = vld [vmem:[#allocation2 + $0x198] sm:$0xff]
  %v143 = vld [vmem:[#allocation2 + $0x1a0] sm:$0xff]
  %v144 = vld [vmem:[#allocation2 + $0x1a8] sm:$0xff]
  %v145 = vld [vmem:[#allocation2 + $0x1b0] sm:$0xff]
  %v146 = vld [vmem:[#allocation2 + $0x1b8] sm:$0xff]
  %v147 = vld [vmem:[#allocation2 + $0x1c0] sm:$0xff]
  %v148 = vld [vmem:[#allocation2 + $0x1c8] sm:$0xff]
  %v149 = vld [vmem:[#allocation2 + $0x1d0] sm:$0xff]
  %v150 = vld [vmem:[#allocation2 + $0x1d8] sm:$0xff]
  %v151 = vld [vmem:[#allocation2 + $0x1e0] sm:$0xff]
  %v152 = vld [vmem:[#allocation2 + $0x1e8] sm:$0xff]
  %v153 = vld [vmem:[#allocation2 + $0x1f0] sm:$0xff]
  %v154 = vld [vmem:[#allocation2 + $0x1f8] sm:$0xff]
  %v155 = vld [vmem:[%s0] sm:$0xf]
  %v156 = vld [vmem:[%s0 + $0x4] sm:$0xf]
  %v157 = vld [vmem:[%s0 + $0x8] sm:$0xf]
  %v158 = vld [vmem:[%s0 + $0xc] sm:$0xf]
  %v159 = vld [vmem:[%s0 + $0x10] sm:$0xf]
  %v160 = vld [vmem:[%s0 + $0x14] sm:$0xf]
  %v161 = vld [vmem:[%s0 + $0x18] sm:$0xf]
  %v162 = vld [vmem:[%s0 + $0x1c] sm:$0xf]
  %v163 = vld [vmem:[%s0 + $0x20] sm:$0xf]
  %v164 = vld [vmem:[%s0 + $0x24] sm:$0xf]
  %v165 = vld [vmem:[%s0 + $0x28] sm:$0xf]
  %v166 = vld [vmem:[%s0 + $0x2c] sm:$0xf]
  %v167 = vld [vmem:[%s0 + $0x30] sm:$0xf]
  %v168 = vld [vmem:[%s0 + $0x34] sm:$0xf]
  %v169 = vld [vmem:[%s0 + $0x38] sm:$0xf]
  %v170 = vld [vmem:[%s0 + $0x3c] sm:$0xf]
  %v171 = vld [vmem:[%s0 + $0x40] sm:$0xf]
  %v172 = vld [vmem:[%s0 + $0x44] sm:$0xf]
  %v173 = vld [vmem:[%s0 + $0x48] sm:$0xf]
  %v174 = vld [vmem:[%s0 + $0x4c] sm:$0xf]
  %v175 = vld [vmem:[%s0 + $0x50] sm:$0xf]
  %v176 = vld [vmem:[%s0 + $0x54] sm:$0xf]
  %v177 = vld [vmem:[%s0 + $0x58] sm:$0xf]
  %v178 = vld [vmem:[%s0 + $0x5c] sm:$0xf]
  %v179 = vld [vmem:[%s0 + $0x60] sm:$0xf]
  %v180 = vld [vmem:[%s0 + $0x64] sm:$0xf]
  %v181 = vld [vmem:[%s0 + $0x68] sm:$0xf]
  %v182 = vld [vmem:[%s0 + $0x6c] sm:$0xf]
  %v183 = vld [vmem:[%s0 + $0x70] sm:$0xf]
  %v184 = vld [vmem:[%s0 + $0x74] sm:$0xf]
  %v185 = vld [vmem:[%s0 + $0x78] sm:$0xf]
  %v186 = vld [vmem:[%s0 + $0x7c] sm:$0xf]
  %v187 = vld [vmem:[%s0 + $0x80] sm:$0xf]
  %v188 = vld [vmem:[%s0 + $0x84] sm:$0xf]
  %v189 = vld [vmem:[%s0 + $0x88] sm:$0xf]
  %v190 = vld [vmem:[%s0 + $0x8c] sm:$0xf]
  %v191 = vld [vmem:[%s0 + $0x90] sm:$0xf]
  %v192 = vld [vmem:[%s0 + $0x94] sm:$0xf]
  %v193 = vld [vmem:[%s0 + $0x98] sm:$0xf]
  %v194 = vld [vmem:[%s0 + $0x9c] sm:$0xf]
  %v195 = vld [vmem:[%s0 + $0xa0] sm:$0xf]
  %v196 = vld [vmem:[%s0 + $0xa4] sm:$0xf]
  %v197 = vld [vmem:[%s0 + $0xa8] sm:$0xf]
  %v198 = vld [vmem:[%s0 + $0xac] sm:$0xf]
  %v199 = vld [vmem:[%s0 + $0xb0] sm:$0xf]
  %v200 = vld [vmem:[%s0 + $0xb4] sm:$0xf]
  %v201 = vld [vmem:[%s0 + $0xb8] sm:$0xf]
  %v202 = vld [vmem:[%s0 + $0xbc] sm:$0xf]
  %v203 = vld [vmem:[%s0 + $0xc0] sm:$0xf]
  %v204 = vld [vmem:[%s0 + $0xc4] sm:$0xf]
  %v205 = vld [vmem:[%s0 + $0xc8] sm:$0xf]
  %v206 = vld [vmem:[%s0 + $0xcc] sm:$0xf]
  %v207 = vld [vmem:[%s0 + $0xd0] sm:$0xf]
  %v208 = vld [vmem:[%s0 + $0xd4] sm:$0xf]
  %v209 = vld [vmem:[%s0 + $0xd8] sm:$0xf]
  %v210 = vld [vmem:[%s0 + $0xdc] sm:$0xf]
  %v211 = vld [vmem:[%s0 + $0xe0] sm:$0xf]
  %v212 = vld [vmem:[%s0 + $0xe4] sm:$0xf]
  %v213 = vld [vmem:[%s0 + $0xe8] sm:$0xf]
  %v214 = vld [vmem:[%s0 + $0xec] sm:$0xf]
  %v215 = vld [vmem:[%s0 + $0xf0] sm:$0xf]
  %v216 = vld [vmem:[%s0 + $0xf4] sm:$0xf]
  %v217 = vld [vmem:[%s0 + $0xf8] sm:$0xf]
  %v218 = vld [vmem:[%s0 + $0xfc] sm:$0xf]
  %v283 = vunpack.c.l.b16 %v155
  %v284 = vunpack.c.l.b16 %v156
  %v285 = vunpack.c.l.b16 %v157
  %v286 = vunpack.c.l.b16 %v158
  %v287 = vunpack.c.l.b16 %v159
  %v288 = vunpack.c.l.b16 %v160
  %v289 = vunpack.c.l.b16 %v161
  %v290 = vunpack.c.l.b16 %v162
  %v291 = vunpack.c.l.b16 %v163
  %v292 = vunpack.c.l.b16 %v164
  %v293 = vunpack.c.l.b16 %v165
  %v294 = vunpack.c.l.b16 %v166
  %v295 = vunpack.c.l.b16 %v167
  %v296 = vunpack.c.l.b16 %v168
  %v297 = vunpack.c.l.b16 %v169
  %v298 = vunpack.c.l.b16 %v170
  %v299 = vunpack.c.l.b16 %v171
  %v300 = vunpack.c.l.b16 %v172
  %v301 = vunpack.c.l.b16 %v173
  %v302 = vunpack.c.l.b16 %v174
  %v303 = vunpack.c.l.b16 %v175
  %v304 = vunpack.c.l.b16 %v176
  %v305 = vunpack.c.l.b16 %v177
  %v306 = vunpack.c.l.b16 %v178
  %v307 = vunpack.c.l.b16 %v179
  %v308 = vunpack.c.l.b16 %v180
  %v309 = vunpack.c.l.b16 %v181
  %v310 = vunpack.c.l.b16 %v182
  %v311 = vunpack.c.l.b16 %v183
  %v312 = vunpack.c.l.b16 %v184
  %v313 = vunpack.c.l.b16 %v185
  %v314 = vunpack.c.l.b16 %v186
  %v315 = vunpack.c.l.b16 %v187
  %v316 = vunpack.c.l.b16 %v188
  %v317 = vunpack.c.l.b16 %v189
  %v318 = vunpack.c.l.b16 %v190
  %v319 = vunpack.c.l.b16 %v191
  %v320 = vunpack.c.l.b16 %v192
  %v321 = vunpack.c.l.b16 %v193
  %v322 = vunpack.c.l.b16 %v194
  %v323 = vunpack.c.l.b16 %v195
  %v324 = vunpack.c.l.b16 %v196
  %v325 = vunpack.c.l.b16 %v197
  %v326 = vunpack.c.l.b16 %v198
  %v327 = vunpack.c.l.b16 %v199
  %v328 = vunpack.c.l.b16 %v200
  %v329 = vunpack.c.l.b16 %v201
  %v330 = vunpack.c.l.b16 %v202
  %v331 = vunpack.c.l.b16 %v203
  %v332 = vunpack.c.l.b16 %v204
  %v333 = vunpack.c.l.b16 %v205
  %v334 = vunpack.c.l.b16 %v206
  %v335 = vunpack.c.l.b16 %v207
  %v336 = vunpack.c.l.b16 %v208
  %v337 = vunpack.c.l.b16 %v209
  %v338 = vunpack.c.l.b16 %v210
  %v339 = vunpack.c.l.b16 %v211
  %v340 = vunpack.c.l.b16 %v212
  %v341 = vunpack.c.l.b16 %v213
  %v342 = vunpack.c.l.b16 %v214
  %v343 = vunpack.c.l.b16 %v215
  %v344 = vunpack.c.l.b16 %v216
  %v345 = vunpack.c.l.b16 %v217
  %v346 = vunpack.c.l.b16 %v218
  %v347 = vpack.c.b16 %v284, %v283
  %v348 = vpack.c.b16 %v286, %v285
  %v349 = vpack.c.b16 %v288, %v287
  %v350 = vpack.c.b16 %v290, %v289
  %v351 = vpack.c.b16 %v292, %v291
  %v352 = vpack.c.b16 %v294, %v293
  %v353 = vpack.c.b16 %v296, %v295
  %v354 = vpack.c.b16 %v298, %v297
  %v355 = vpack.c.b16 %v300, %v299
  %v356 = vpack.c.b16 %v302, %v301
  %v357 = vpack.c.b16 %v304, %v303
  %v358 = vpack.c.b16 %v306, %v305
  %v359 = vpack.c.b16 %v308, %v307
  %v360 = vpack.c.b16 %v310, %v309
  %v361 = vpack.c.b16 %v312, %v311
  %v362 = vpack.c.b16 %v314, %v313
  %v363 = vpack.c.b16 %v316, %v315
  %v364 = vpack.c.b16 %v318, %v317
  %v365 = vpack.c.b16 %v320, %v319
  %v366 = vpack.c.b16 %v322, %v321
  %v367 = vpack.c.b16 %v324, %v323
  %v368 = vpack.c.b16 %v326, %v325
  %v369 = vpack.c.b16 %v328, %v327
  %v370 = vpack.c.b16 %v330, %v329
  %v371 = vpack.c.b16 %v332, %v331
  %v372 = vpack.c.b16 %v334, %v333
  %v373 = vpack.c.b16 %v336, %v335
  %v374 = vpack.c.b16 %v338, %v337
  %v375 = vpack.c.b16 %v340, %v339
  %v376 = vpack.c.b16 %v342, %v341
  %v377 = vpack.c.b16 %v344, %v343
  %v378 = vpack.c.b16 %v346, %v345
  %v383 = vunpack.c.l.b16 %v87
  %v384 = vunpack.c.l.b16 %v88
  %v385 = vunpack.c.l.b16 %v89
  %v386 = vunpack.c.l.b16 %v90
  %v387 = vpack.c.b16 %v384, %v383
  %v388 = vpack.c.b16 %v386, %v385
  %vm391 = vcmask 261120
  %v393 = vsel %vm391, %v347, 0
  %v396 = vsel %vm391, %v348, 0
  %v399 = vsel %vm391, %v349, 0
  %v402 = vsel %vm391, %v350, 0
  %v405 = vsel %vm391, %v351, 0
  %v408 = vsel %vm391, %v352, 0
  %v411 = vsel %vm391, %v353, 0
  %v414 = vsel %vm391, %v354, 0
  %v417 = vsel %vm391, %v355, 0
  %v420 = vsel %vm391, %v356, 0
  %v423 = vsel %vm391, %v357, 0
  %v426 = vsel %vm391, %v358, 0
  %v429 = vsel %vm391, %v359, 0
  %v432 = vsel %vm391, %v360, 0
  %v435 = vsel %vm391, %v361, 0
  %v438 = vsel %vm391, %v362, 0
  %v441 = vsel %vm391, %v363, 0
  %v444 = vsel %vm391, %v364, 0
  %v447 = vsel %vm391, %v365, 0
  %v450 = vsel %vm391, %v366, 0
  %v453 = vsel %vm391, %v367, 0
  %v456 = vsel %vm391, %v368, 0
  %v459 = vsel %vm391, %v369, 0
  %v462 = vsel %vm391, %v370, 0
  %v465 = vsel %vm391, %v371, 0
  %v468 = vsel %vm391, %v372, 0
  %v471 = vsel %vm391, %v373, 0
  %v474 = vsel %vm391, %v374, 0
  %v477 = vsel %vm391, %v375, 0
  %v480 = vsel %vm391, %v376, 0
  %v483 = vsel %vm391, %v377, 0
  %v486 = vsel %vm391, %v378, 0
  %488 = vmatprep.subr.bf16.mxu0 0
  %489 = vmatpush1.bf16.msra.mxu0 %v387
  %490 = vmatprep.subr.bf16.mxu0 0
  %491 = vmatpush1.bf16.msra.mxu0 %v388
  %492 = vmatprep.subr.bf16.mxu0 0
  %493 = vmatpush1.bf16.msra.mxu0 0
  %494 = vmatprep.subr.bf16.mxu0 0
  %495 = vmatpush1.bf16.msra.mxu0 0
  %496 = vmatprep.subr.bf16.mxu0 0
  %497 = vmatpush1.bf16.msra.mxu0 0
  %498 = vmatprep.subr.bf16.mxu0 0
  %499 = vmatpush1.bf16.msra.mxu0 0
  %500 = vmatprep.subr.bf16.mxu0 0
  %501 = vmatpush1.bf16.msra.mxu0 0
  %502 = vmatprep.subr.bf16.mxu0 0
  %503 = vmatpush1.bf16.msra.mxu0 0
  %504 = vmatprep.subr.bf16.mxu0 0
  %505 = vmatpush1.bf16.msra.mxu0 0
  %506 = vmatprep.subr.bf16.mxu0 0
  %507 = vmatpush1.bf16.msra.mxu0 0
  %508 = vmatprep.subr.bf16.mxu0 0
  %509 = vmatpush1.bf16.msra.mxu0 0
  %510 = vmatprep.subr.bf16.mxu0 0
  %511 = vmatpush1.bf16.msra.mxu0 0
  %512 = vmatprep.subr.bf16.mxu0 0
  %513 = vmatpush1.bf16.msra.mxu0 0
  %514 = vmatprep.subr.bf16.mxu0 0
  %515 = vmatpush1.bf16.msra.mxu0 0
  %516 = vmatprep.subr.bf16.mxu0 0
  %517 = vmatpush1.bf16.msra.mxu0 0
  %518 = vmatprep.subr.bf16.mxu0 0
  %519 = vmatpush1.bf16.msra.mxu0 0
  %520 = vmatprep.mubr.bf16.mxu0 0
  %521 = vmatmul.mubr.bf16.gmra.mrb[0].mxu0 %v393
  %v522 = vpop.f32.mrb[0].mxu0
  %v523 = vadd.f32 0.0, %v522
  %v524 = vpop.f32.mrb[0].mxu0
  %v525 = vpop.f32.mrb[0].mxu0
  %v526 = vadd.f32 0.0, %v525
  %v527 = vpop.f32.mrb[0].mxu0
  %528 = vmatprep.mubr.bf16.mxu0 0
  %529 = vmatmul.mubr.bf16.gmra.mrb[0].mxu0 %v396
  %v530 = vpop.f32.mrb[0].mxu0
  %v531 = vadd.f32 0.0, %v530
  %v532 = vpop.f32.mrb[0].mxu0
  %v533 = vpop.f32.mrb[0].mxu0
  %v534 = vadd.f32 0.0, %v533
  %v535 = vpop.f32.mrb[0].mxu0
  %536 = vmatprep.mubr.bf16.mxu0 0
  %537 = vmatmul.mubr.bf16.gmra.mrb[0].mxu0 %v399
  %v538 = vpop.f32.mrb[0].mxu0
  %v539 = vadd.f32 0.0, %v538
  %v540 = vpop.f32.mrb[0].mxu0
  %v541 = vpop.f32.mrb[0].mxu0
  %v542 = vadd.f32 0.0, %v541
  %v543 = vpop.f32.mrb[0].mxu0
  %544 = vmatprep.mubr.bf16.mxu0 0
  %545 = vmatmul.mubr.bf16.gmra.mrb[0].mxu0 %v402
  %v546 = vpop.f32.mrb[0].mxu0
  %v547 = vadd.f32 0.0, %v546
  %v548 = vpop.f32.mrb[0].mxu0
  %v549 = vpop.f32.mrb[0].mxu0
  %v550 = vadd.f32 0.0, %v549
  %v551 = vpop.f32.mrb[0].mxu0
  %552 = vmatprep.mubr.bf16.mxu0 0
  %553 = vmatmul.mubr.bf16.gmra.mrb[0].mxu0 %v405
  %v554 = vpop.f32.mrb[0].mxu0
  %v555 = vadd.f32 0.0, %v554
  %v556 = vpop.f32.mrb[0].mxu0
  %v557 = vpop.f32.mrb[0].mxu0
  %v558 = vadd.f32 0.0, %v557
  %v559 = vpop.f32.mrb[0].mxu0
  %560 = vmatprep.mubr.bf16.mxu0 0
  %561 = vmatmul.mubr.bf16.gmra.mrb[0].mxu0 %v408
  %v562 = vpop.f32.mrb[0].mxu0
  %v563 = vadd.f32 0.0, %v562
  %v564 = vpop.f32.mrb[0].mxu0
  %v565 = vpop.f32.mrb[0].mxu0
  %v566 = vadd.f32 0.0, %v565
  %v567 = vpop.f32.mrb[0].mxu0
  %568 = vmatprep.mubr.bf16.mxu0 0
  %569 = vmatmul.mubr.bf16.gmra.mrb[0].mxu0 %v411
  %v570 = vpop.f32.mrb[0].mxu0
  %v571 = vadd.f32 0.0, %v570
  %v572 = vpop.f32.mrb[0].mxu0
  %v573 = vpop.f32.mrb[0].mxu0
  %v574 = vadd.f32 0.0, %v573
  %v575 = vpop.f32.mrb[0].mxu0
  %576 = vmatprep.mubr.bf16.mxu0 0
  %577 = vmatmul.mubr.bf16.gmra.mrb[0].mxu0 %v414
  %v578 = vpop.f32.mrb[0].mxu0
  %v579 = vadd.f32 0.0, %v578
  %v580 = vpop.f32.mrb[0].mxu0
  %v581 = vpop.f32.mrb[0].mxu0
  %v582 = vadd.f32 0.0, %v581
  %v583 = vpop.f32.mrb[0].mxu0
  %584 = vmatprep.mubr.bf16.mxu0 0
  %585 = vmatmul.mubr.bf16.gmra.mrb[0].mxu0 %v417
  %v586 = vpop.f32.mrb[0].mxu0
  %v587 = vadd.f32 0.0, %v586
  %v588 = vpop.f32.mrb[0].mxu0
  %v589 = vpop.f32.mrb[0].mxu0
  %v590 = vadd.f32 0.0, %v589
  %v591 = vpop.f32.mrb[0].mxu0
  %592 = vmatprep.mubr.bf16.mxu0 0
  %593 = vmatmul.mubr.bf16.gmra.mrb[0].mxu0 %v420
  %v594 = vpop.f32.mrb[0].mxu0
  %v595 = vadd.f32 0.0, %v594
  %v596 = vpop.f32.mrb[0].mxu0
  %v597 = vpop.f32.mrb[0].mxu0
  %v598 = vadd.f32 0.0, %v597
  %v599 = vpop.f32.mrb[0].mxu0
  %600 = vmatprep.mubr.bf16.mxu0 0
  %601 = vmatmul.mubr.bf16.gmra.mrb[0].mxu0 %v423
  %v602 = vpop.f32.mrb[0].mxu0
  %v603 = vadd.f32 0.0, %v602
  %v604 = vpop.f32.mrb[0].mxu0
  %v605 = vpop.f32.mrb[0].mxu0
  %v606 = vadd.f32 0.0, %v605
  %v607 = vpop.f32.mrb[0].mxu0
  %608 = vmatprep.mubr.bf16.mxu0 0
  %609 = vmatmul.mubr.bf16.gmra.mrb[0].mxu0 %v426
  %v610 = vpop.f32.mrb[0].mxu0
  %v611 = vadd.f32 0.0, %v610
  %v612 = vpop.f32.mrb[0].mxu0
  %v613 = vpop.f32.mrb[0].mxu0
  %v614 = vadd.f32 0.0, %v613
  %v615 = vpop.f32.mrb[0].mxu0
  %616 = vmatprep.mubr.bf16.mxu0 0
  %617 = vmatmul.mubr.bf16.gmra.mrb[0].mxu0 %v429
  %v618 = vpop.f32.mrb[0].mxu0
  %v619 = vadd.f32 0.0, %v618
  %v620 = vpop.f32.mrb[0].mxu0
  %v621 = vpop.f32.mrb[0].mxu0
  %v622 = vadd.f32 0.0, %v621
  %v623 = vpop.f32.mrb[0].mxu0
  %624 = vmatprep.mubr.bf16.mxu0 0
  %625 = vmatmul.mubr.bf16.gmra.mrb[0].mxu0 %v432
  %v626 = vpop.f32.mrb[0].mxu0
  %v627 = vadd.f32 0.0, %v626
  %v628 = vpop.f32.mrb[0].mxu0
  %v629 = vpop.f32.mrb[0].mxu0
  %v630 = vadd.f32 0.0, %v629
  %v631 = vpop.f32.mrb[0].mxu0
  %632 = vmatprep.mubr.bf16.mxu0 0
  %633 = vmatmul.mubr.bf16.gmra.mrb[0].mxu0 %v435
  %v634 = vpop.f32.mrb[0].mxu0
  %v635 = vadd.f32 0.0, %v634
  %v636 = vpop.f32.mrb[0].mxu0
  %v637 = vpop.f32.mrb[0].mxu0
  %v638 = vadd.f32 0.0, %v637
  %v639 = vpop.f32.mrb[0].mxu0
  %640 = vmatprep.mubr.bf16.mxu0 0
  %641 = vmatmul.mubr.bf16.gmra.mrb[0].mxu0 %v438
  %v642 = vpop.f32.mrb[0].mxu0
  %v643 = vadd.f32 0.0, %v642
  %v644 = vpop.f32.mrb[0].mxu0
  %v645 = vpop.f32.mrb[0].mxu0
  %v646 = vadd.f32 0.0, %v645
  %v647 = vpop.f32.mrb[0].mxu0
  %648 = vmatprep.mubr.bf16.mxu0 0
  %649 = vmatmul.mubr.bf16.gmra.mrb[0].mxu0 %v441
  %v650 = vpop.f32.mrb[0].mxu0
  %v651 = vadd.f32 0.0, %v650
  %v652 = vpop.f32.mrb[0].mxu0
  %v653 = vpop.f32.mrb[0].mxu0
  %v654 = vadd.f32 0.0, %v653
  %v655 = vpop.f32.mrb[0].mxu0
  %656 = vmatprep.mubr.bf16.mxu0 0
  %657 = vmatmul.mubr.bf16.gmra.mrb[0].mxu0 %v444
  %v658 = vpop.f32.mrb[0].mxu0
  %v659 = vadd.f32 0.0, %v658
  %v660 = vpop.f32.mrb[0].mxu0
  %v661 = vpop.f32.mrb[0].mxu0
  %v662 = vadd.f32 0.0, %v661
  %v663 = vpop.f32.mrb[0].mxu0
  %664 = vmatprep.mubr.bf16.mxu0 0
  %665 = vmatmul.mubr.bf16.gmra.mrb[0].mxu0 %v447
  %v666 = vpop.f32.mrb[0].mxu0
  %v667 = vadd.f32 0.0, %v666
  %v668 = vpop.f32.mrb[0].mxu0
  %v669 = vpop.f32.mrb[0].mxu0
  %v670 = vadd.f32 0.0, %v669
  %v671 = vpop.f32.mrb[0].mxu0
  %672 = vmatprep.mubr.bf16.mxu0 0
  %673 = vmatmul.mubr.bf16.gmra.mrb[0].mxu0 %v450
  %v674 = vpop.f32.mrb[0].mxu0
  %v675 = vadd.f32 0.0, %v674
  %v676 = vpop.f32.mrb[0].mxu0
  %v677 = vpop.f32.mrb[0].mxu0
  %v678 = vadd.f32 0.0, %v677
  %v679 = vpop.f32.mrb[0].mxu0
  %680 = vmatprep.mubr.bf16.mxu0 0
  %681 = vmatmul.mubr.bf16.gmra.mrb[0].mxu0 %v453
  %v682 = vpop.f32.mrb[0].mxu0
  %v683 = vadd.f32 0.0, %v682
  %v684 = vpop.f32.mrb[0].mxu0
  %v685 = vpop.f32.mrb[0].mxu0
  %v686 = vadd.f32 0.0, %v685
  %v687 = vpop.f32.mrb[0].mxu0
  %688 = vmatprep.mubr.bf16.mxu0 0
  %689 = vmatmul.mubr.bf16.gmra.mrb[0].mxu0 %v456
  %v690 = vpop.f32.mrb[0].mxu0
  %v691 = vadd.f32 0.0, %v690
  %v692 = vpop.f32.mrb[0].mxu0
  %v693 = vpop.f32.mrb[0].mxu0
  %v694 = vadd.f32 0.0, %v693
  %v695 = vpop.f32.mrb[0].mxu0
  %696 = vmatprep.mubr.bf16.mxu0 0
  %697 = vmatmul.mubr.bf16.gmra.mrb[0].mxu0 %v459
  %v698 = vpop.f32.mrb[0].mxu0
  %v699 = vadd.f32 0.0, %v698
  %v700 = vpop.f32.mrb[0].mxu0
  %v701 = vpop.f32.mrb[0].mxu0
  %v702 = vadd.f32 0.0, %v701
  %v703 = vpop.f32.mrb[0].mxu0
  %704 = vmatprep.mubr.bf16.mxu0 0
  %705 = vmatmul.mubr.bf16.gmra.mrb[0].mxu0 %v462
  %v706 = vpop.f32.mrb[0].mxu0
  %v707 = vadd.f32 0.0, %v706
  %v708 = vpop.f32.mrb[0].mxu0
  %v709 = vpop.f32.mrb[0].mxu0
  %v710 = vadd.f32 0.0, %v709
  %v711 = vpop.f32.mrb[0].mxu0
  %712 = vmatprep.mubr.bf16.mxu0 0
  %713 = vmatmul.mubr.bf16.gmra.mrb[0].mxu0 %v465
  %v714 = vpop.f32.mrb[0].mxu0
  %v715 = vadd.f32 0.0, %v714
  %v716 = vpop.f32.mrb[0].mxu0
  %v717 = vpop.f32.mrb[0].mxu0
  %v718 = vadd.f32 0.0, %v717
  %v719 = vpop.f32.mrb[0].mxu0
  %720 = vmatprep.mubr.bf16.mxu0 0
  %721 = vmatmul.mubr.bf16.gmra.mrb[0].mxu0 %v468
  %v722 = vpop.f32.mrb[0].mxu0
  %v723 = vadd.f32 0.0, %v722
  %v724 = vpop.f32.mrb[0].mxu0
  %v725 = vpop.f32.mrb[0].mxu0
  %v726 = vadd.f32 0.0, %v725
  %v727 = vpop.f32.mrb[0].mxu0
  %728 = vmatprep.mubr.bf16.mxu0 0
  %729 = vmatmul.mubr.bf16.gmra.mrb[0].mxu0 %v471
  %v730 = vpop.f32.mrb[0].mxu0
  %v731 = vadd.f32 0.0, %v730
  %v732 = vpop.f32.mrb[0].mxu0
  %v733 = vpop.f32.mrb[0].mxu0
  %v734 = vadd.f32 0.0, %v733
  %v735 = vpop.f32.mrb[0].mxu0
  %736 = vmatprep.mubr.bf16.mxu0 0
  %737 = vmatmul.mubr.bf16.gmra.mrb[0].mxu0 %v474
  %v738 = vpop.f32.mrb[0].mxu0
  %v739 = vadd.f32 0.0, %v738
  %v740 = vpop.f32.mrb[0].mxu0
  %v741 = vpop.f32.mrb[0].mxu0
  %v742 = vadd.f32 0.0, %v741
  %v743 = vpop.f32.mrb[0].mxu0
  %744 = vmatprep.mubr.bf16.mxu0 0
  %745 = vmatmul.mubr.bf16.gmra.mrb[0].mxu0 %v477
  %v746 = vpop.f32.mrb[0].mxu0
  %v747 = vadd.f32 0.0, %v746
  %v748 = vpop.f32.mrb[0].mxu0
  %v749 = vpop.f32.mrb[0].mxu0
  %v750 = vadd.f32 0.0, %v749
  %v751 = vpop.f32.mrb[0].mxu0
  %752 = vmatprep.mubr.bf16.mxu0 0
  %753 = vmatmul.mubr.bf16.gmra.mrb[0].mxu0 %v480
  %v754 = vpop.f32.mrb[0].mxu0
  %v755 = vadd.f32 0.0, %v754
  %v756 = vpop.f32.mrb[0].mxu0
  %v757 = vpop.f32.mrb[0].mxu0
  %v758 = vadd.f32 0.0, %v757
  %v759 = vpop.f32.mrb[0].mxu0
  %760 = vmatprep.mubr.bf16.mxu0 0
  %761 = vmatmul.mubr.bf16.gmra.mrb[0].mxu0 %v483
  %v762 = vpop.f32.mrb[0].mxu0
  %v763 = vadd.f32 0.0, %v762
  %v764 = vpop.f32.mrb[0].mxu0
  %v765 = vpop.f32.mrb[0].mxu0
  %v766 = vadd.f32 0.0, %v765
  %v767 = vpop.f32.mrb[0].mxu0
  %768 = vmatprep.mubr.bf16.mxu0 0
  %769 = vmatmul.mubr.bf16.gmra.mrb[0].mxu0 %v486
  %v770 = vpop.f32.mrb[0].mxu0
  %v771 = vadd.f32 0.0, %v770
  %v772 = vpop.f32.mrb[0].mxu0
  %v773 = vpop.f32.mrb[0].mxu0
  %v774 = vadd.f32 0.0, %v773
  %v775 = vpop.f32.mrb[0].mxu0
  %776 = vdwg.mxu0
  %v777 = vadd.f32 %v91, %v523
  %v778 = vadd.f32 %v92, %v526
  %v779 = vadd.f32 %v93, %v531
  %v780 = vadd.f32 %v94, %v534
  %v781 = vadd.f32 %v95, %v539
  %v782 = vadd.f32 %v96, %v542
  %v783 = vadd.f32 %v97, %v547
  %v784 = vadd.f32 %v98, %v550
  %v785 = vadd.f32 %v99, %v555
  %v786 = vadd.f32 %v100, %v558
  %v787 = vadd.f32 %v101, %v563
  %v788 = vadd.f32 %v102, %v566
  %v789 = vadd.f32 %v103, %v571
  %v790 = vadd.f32 %v104, %v574
  %v791 = vadd.f32 %v105, %v579
  %v792 = vadd.f32 %v106, %v582
  %v793 = vadd.f32 %v107, %v587
  %v794 = vadd.f32 %v108, %v590
  %v795 = vadd.f32 %v109, %v595
  %v796 = vadd.f32 %v110, %v598
  %v797 = vadd.f32 %v111, %v603
  %v798 = vadd.f32 %v112, %v606
  %v799 = vadd.f32 %v113, %v611
  %v800 = vadd.f32 %v114, %v614
  %v801 = vadd.f32 %v115, %v619
  %v802 = vadd.f32 %v116, %v622
  %v803 = vadd.f32 %v117, %v627
  %v804 = vadd.f32 %v118, %v630
  %v805 = vadd.f32 %v119, %v635
  %v806 = vadd.f32 %v120, %v638
  %v807 = vadd.f32 %v121, %v643
  %v808 = vadd.f32 %v122, %v646
  %v809 = vadd.f32 %v123, %v651
  %v810 = vadd.f32 %v124, %v654
  %v811 = vadd.f32 %v125, %v659
  %v812 = vadd.f32 %v126, %v662
  %v813 = vadd.f32 %v127, %v667
  %v814 = vadd.f32 %v128, %v670
  %v815 = vadd.f32 %v129, %v675
  %v816 = vadd.f32 %v130, %v678
  %v817 = vadd.f32 %v131, %v683
  %v818 = vadd.f32 %v132, %v686
  %v819 = vadd.f32 %v133, %v691
  %v820 = vadd.f32 %v134, %v694
  %v821 = vadd.f32 %v135, %v699
  %v822 = vadd.f32 %v136, %v702
  %v823 = vadd.f32 %v137, %v707
  %v824 = vadd.f32 %v138, %v710
  %v825 = vadd.f32 %v139, %v715
  %v826 = vadd.f32 %v140, %v718
  %v827 = vadd.f32 %v141, %v723
  %v828 = vadd.f32 %v142, %v726
  %v829 = vadd.f32 %v143, %v731
  %v830 = vadd.f32 %v144, %v734
  %v831 = vadd.f32 %v145, %v739
  %v832 = vadd.f32 %v146, %v742
  %v833 = vadd.f32 %v147, %v747
  %v834 = vadd.f32 %v148, %v750
  %v835 = vadd.f32 %v149, %v755
  %v836 = vadd.f32 %v150, %v758
  %v837 = vadd.f32 %v151, %v763
  %v838 = vadd.f32 %v152, %v766
  %v839 = vadd.f32 %v153, %v771
  %v840 = vadd.f32 %v154, %v774
  %841 = vst.msk [vmem:[#allocation2] sm:$0xff] %vm391, %v777
  %842 = vst.msk [vmem:[#allocation2 + $0x8] sm:$0xff] %vm391, %v778
  %843 = vst.msk [vmem:[#allocation2 + $0x10] sm:$0xff] %vm391, %v779
  %844 = vst.msk [vmem:[#allocation2 + $0x18] sm:$0xff] %vm391, %v780
  %845 = vst.msk [vmem:[#allocation2 + $0x20] sm:$0xff] %vm391, %v781
  %846 = vst.msk [vmem:[#allocation2 + $0x28] sm:$0xff] %vm391, %v782
  %847 = vst.msk [vmem:[#allocation2 + $0x30] sm:$0xff] %vm391, %v783
  %848 = vst.msk [vmem:[#allocation2 + $0x38] sm:$0xff] %vm391, %v784
  %849 = vst.msk [vmem:[#allocation2 + $0x40] sm:$0xff] %vm391, %v785
  %850 = vst.msk [vmem:[#allocation2 + $0x48] sm:$0xff] %vm391, %v786
  %851 = vst.msk [vmem:[#allocation2 + $0x50] sm:$0xff] %vm391, %v787
  %852 = vst.msk [vmem:[#allocation2 + $0x58] sm:$0xff] %vm391, %v788
  %853 = vst.msk [vmem:[#allocation2 + $0x60] sm:$0xff] %vm391, %v789
  %854 = vst.msk [vmem:[#allocation2 + $0x68] sm:$0xff] %vm391, %v790
  %855 = vst.msk [vmem:[#allocation2 + $0x70] sm:$0xff] %vm391, %v791
  %856 = vst.msk [vmem:[#allocation2 + $0x78] sm:$0xff] %vm391, %v792
  %857 = vst.msk [vmem:[#allocation2 + $0x80] sm:$0xff] %vm391, %v793
  %858 = vst.msk [vmem:[#allocation2 + $0x88] sm:$0xff] %vm391, %v794
  %859 = vst.msk [vmem:[#allocation2 + $0x90] sm:$0xff] %vm391, %v795
  %860 = vst.msk [vmem:[#allocation2 + $0x98] sm:$0xff] %vm391, %v796
  %861 = vst.msk [vmem:[#allocation2 + $0xa0] sm:$0xff] %vm391, %v797
  %862 = vst.msk [vmem:[#allocation2 + $0xa8] sm:$0xff] %vm391, %v798
  %863 = vst.msk [vmem:[#allocation2 + $0xb0] sm:$0xff] %vm391, %v799
  %864 = vst.msk [vmem:[#allocation2 + $0xb8] sm:$0xff] %vm391, %v800
  %865 = vst.msk [vmem:[#allocation2 + $0xc0] sm:$0xff] %vm391, %v801
  %866 = vst.msk [vmem:[#allocation2 + $0xc8] sm:$0xff] %vm391, %v802
  %867 = vst.msk [vmem:[#allocation2 + $0xd0] sm:$0xff] %vm391, %v803
  %868 = vst.msk [vmem:[#allocation2 + $0xd8] sm:$0xff] %vm391, %v804
  %869 = vst.msk [vmem:[#allocation2 + $0xe0] sm:$0xff] %vm391, %v805
  %870 = vst.msk [vmem:[#allocation2 + $0xe8] sm:$0xff] %vm391, %v806
  %871 = vst.msk [vmem:[#allocation2 + $0xf0] sm:$0xff] %vm391, %v807
  %872 = vst.msk [vmem:[#allocation2 + $0xf8] sm:$0xff] %vm391, %v808
  %873 = vst.msk [vmem:[#allocation2 + $0x100] sm:$0xff] %vm391, %v809
  %874 = vst.msk [vmem:[#allocation2 + $0x108] sm:$0xff] %vm391, %v810
  %875 = vst.msk [vmem:[#allocation2 + $0x110] sm:$0xff] %vm391, %v811
  %876 = vst.msk [vmem:[#allocation2 + $0x118] sm:$0xff] %vm391, %v812
  %877 = vst.msk [vmem:[#allocation2 + $0x120] sm:$0xff] %vm391, %v813
  %878 = vst.msk [vmem:[#allocation2 + $0x128] sm:$0xff] %vm391, %v814
  %879 = vst.msk [vmem:[#allocation2 + $0x130] sm:$0xff] %vm391, %v815
  %880 = vst.msk [vmem:[#allocation2 + $0x138] sm:$0xff] %vm391, %v816
  %881 = vst.msk [vmem:[#allocation2 + $0x140] sm:$0xff] %vm391, %v817
  %882 = vst.msk [vmem:[#allocation2 + $0x148] sm:$0xff] %vm391, %v818
  %883 = vst.msk [vmem:[#allocation2 + $0x150] sm:$0xff] %vm391, %v819
  %884 = vst.msk [vmem:[#allocation2 + $0x158] sm:$0xff] %vm391, %v820
  %885 = vst.msk [vmem:[#allocation2 + $0x160] sm:$0xff] %vm391, %v821
  %886 = vst.msk [vmem:[#allocation2 + $0x168] sm:$0xff] %vm391, %v822
  %887 = vst.msk [vmem:[#allocation2 + $0x170] sm:$0xff] %vm391, %v823
  %888 = vst.msk [vmem:[#allocation2 + $0x178] sm:$0xff] %vm391, %v824
  %889 = vst.msk [vmem:[#allocation2 + $0x180] sm:$0xff] %vm391, %v825
  %890 = vst.msk [vmem:[#allocation2 + $0x188] sm:$0xff] %vm391, %v826
  %891 = vst.msk [vmem:[#allocation2 + $0x190] sm:$0xff] %vm391, %v827
  %892 = vst.msk [vmem:[#allocation2 + $0x198] sm:$0xff] %vm391, %v828
  %893 = vst.msk [vmem:[#allocation2 + $0x1a0] sm:$0xff] %vm391, %v829
  %894 = vst.msk [vmem:[#allocation2 + $0x1a8] sm:$0xff] %vm391, %v830
  %895 = vst.msk [vmem:[#allocation2 + $0x1b0] sm:$0xff] %vm391, %v831
  %896 = vst.msk [vmem:[#allocation2 + $0x1b8] sm:$0xff] %vm391, %v832
  %897 = vst.msk [vmem:[#allocation2 + $0x1c0] sm:$0xff] %vm391, %v833
  %898 = vst.msk [vmem:[#allocation2 + $0x1c8] sm:$0xff] %vm391, %v834
  %899 = vst.msk [vmem:[#allocation2 + $0x1d0] sm:$0xff] %vm391, %v835
  %900 = vst.msk [vmem:[#allocation2 + $0x1d8] sm:$0xff] %vm391, %v836
  %901 = vst.msk [vmem:[#allocation2 + $0x1e0] sm:$0xff] %vm391, %v837
  %902 = vst.msk [vmem:[#allocation2 + $0x1e8] sm:$0xff] %vm391, %v838
  %903 = vst.msk [vmem:[#allocation2 + $0x1f0] sm:$0xff] %vm391, %v839
  %904 = vst.msk [vmem:[#allocation2 + $0x1f8] sm:$0xff] %vm391, %v840
  // Predicated region
  $region22: #{tpu_custom_call.1} parent=0 // pred_check
    %p905 = pneg %p18
  $region23: #{tpu_custom_call.1} parent=0 // pred_check_branch
    %907 = sbr.rel (%p905) target = $region25
  $region24: #{tpu_custom_call.1} parent=0 // pred_region
    %v908 = vld [vmem:[#allocation2] sm:$0xff]
    %v909 = vld [vmem:[#allocation2 + $0x8] sm:$0xff]
    %v910 = vld [vmem:[#allocation2 + $0x10] sm:$0xff]
    %v911 = vld [vmem:[#allocation2 + $0x18] sm:$0xff]
    %v912 = vld [vmem:[#allocation2 + $0x20] sm:$0xff]
    %v913 = vld [vmem:[#allocation2 + $0x28] sm:$0xff]
    %v914 = vld [vmem:[#allocation2 + $0x30] sm:$0xff]
    %v915 = vld [vmem:[#allocation2 + $0x38] sm:$0xff]
    %v916 = vld [vmem:[#allocation2 + $0x40] sm:$0xff]
    %v917 = vld [vmem:[#allocation2 + $0x48] sm:$0xff]
    %v918 = vld [vmem:[#allocation2 + $0x50] sm:$0xff]
    %v919 = vld [vmem:[#allocation2 + $0x58] sm:$0xff]
    %v920 = vld [vmem:[#allocation2 + $0x60] sm:$0xff]
    %v921 = vld [vmem:[#allocation2 + $0x68] sm:$0xff]
    %v922 = vld [vmem:[#allocation2 + $0x70] sm:$0xff]
    %v923 = vld [vmem:[#allocation2 + $0x78] sm:$0xff]
    %v924 = vld [vmem:[#allocation2 + $0x80] sm:$0xff]
    %v925 = vld [vmem:[#allocation2 + $0x88] sm:$0xff]
    %v926 = vld [vmem:[#allocation2 + $0x90] sm:$0xff]
    %v927 = vld [vmem:[#allocation2 + $0x98] sm:$0xff]
    %v928 = vld [vmem:[#allocation2 + $0xa0] sm:$0xff]
    %v929 = vld [vmem:[#allocation2 + $0xa8] sm:$0xff]
    %v930 = vld [vmem:[#allocation2 + $0xb0] sm:$0xff]
    %v931 = vld [vmem:[#allocation2 + $0xb8] sm:$0xff]
    %v932 = vld [vmem:[#allocation2 + $0xc0] sm:$0xff]
    %v933 = vld [vmem:[#allocation2 + $0xc8] sm:$0xff]
    %v934 = vld [vmem:[#allocation2 + $0xd0] sm:$0xff]
    %v935 = vld [vmem:[#allocation2 + $0xd8] sm:$0xff]
    %v936 = vld [vmem:[#allocation2 + $0xe0] sm:$0xff]
    %v937 = vld [vmem:[#allocation2 + $0xe8] sm:$0xff]
    %v938 = vld [vmem:[#allocation2 + $0xf0] sm:$0xff]
    %v939 = vld [vmem:[#allocation2 + $0xf8] sm:$0xff]
    %v940 = vld [vmem:[#allocation2 + $0x100] sm:$0xff]
    %v941 = vld [vmem:[#allocation2 + $0x108] sm:$0xff]
    %v942 = vld [vmem:[#allocation2 + $0x110] sm:$0xff]
    %v943 = vld [vmem:[#allocation2 + $0x118] sm:$0xff]
    %v944 = vld [vmem:[#allocation2 + $0x120] sm:$0xff]
    %v945 = vld [vmem:[#allocation2 + $0x128] sm:$0xff]
    %v946 = vld [vmem:[#allocation2 + $0x130] sm:$0xff]
    %v947 = vld [vmem:[#allocation2 + $0x138] sm:$0xff]
    %v948 = vld [vmem:[#allocation2 + $0x140] sm:$0xff]
    %v949 = vld [vmem:[#allocation2 + $0x148] sm:$0xff]
    %v950 = vld [vmem:[#allocation2 + $0x150] sm:$0xff]
    %v951 = vld [vmem:[#allocation2 + $0x158] sm:$0xff]
    %v952 = vld [vmem:[#allocation2 + $0x160] sm:$0xff]
    %v953 = vld [vmem:[#allocation2 + $0x168] sm:$0xff]
    %v954 = vld [vmem:[#allocation2 + $0x170] sm:$0xff]
    %v955 = vld [vmem:[#allocation2 + $0x178] sm:$0xff]
    %v956 = vld [vmem:[#allocation2 + $0x180] sm:$0xff]
    %v957 = vld [vmem:[#allocation2 + $0x188] sm:$0xff]
    %v958 = vld [vmem:[#allocation2 + $0x190] sm:$0xff]
    %v959 = vld [vmem:[#allocation2 + $0x198] sm:$0xff]
    %v960 = vld [vmem:[#allocation2 + $0x1a0] sm:$0xff]
    %v961 = vld [vmem:[#allocation2 + $0x1a8] sm:$0xff]
    %v962 = vld [vmem:[#allocation2 + $0x1b0] sm:$0xff]
    %v963 = vld [vmem:[#allocation2 + $0x1b8] sm:$0xff]
    %v964 = vld [vmem:[#allocation2 + $0x1c0] sm:$0xff]
    %v965 = vld [vmem:[#allocation2 + $0x1c8] sm:$0xff]
    %v966 = vld [vmem:[#allocation2 + $0x1d0] sm:$0xff]
    %v967 = vld [vmem:[#allocation2 + $0x1d8] sm:$0xff]
    %v968 = vld [vmem:[#allocation2 + $0x1e0] sm:$0xff]
    %v969 = vld [vmem:[#allocation2 + $0x1e8] sm:$0xff]
    %v970 = vld [vmem:[#allocation2 + $0x1f0] sm:$0xff]
    %v971 = vld [vmem:[#allocation2 + $0x1f8] sm:$0xff]
    %v972 = vld [vmem:[%s2] sm:$0x1]
    %v974 = vlaneseq
    %v975 = vshrl.u32 %v974, 7
    %v976 = vsub.s32 0, %v975
    %v977 = vrot.slane %v972, %v976
    %v979 = vmul.f32 %v908, %v977
    %v980 = vmul.f32 %v909, %v977
    %v981 = vmul.f32 %v910, %v977
    %v982 = vmul.f32 %v911, %v977
    %v983 = vmul.f32 %v912, %v977
    %v984 = vmul.f32 %v913, %v977
    %v985 = vmul.f32 %v914, %v977
    %v986 = vmul.f32 %v915, %v977
    %v987 = vmul.f32 %v916, %v977
    %v988 = vmul.f32 %v917, %v977
    %v989 = vmul.f32 %v918, %v977
    %v990 = vmul.f32 %v919, %v977
    %v991 = vmul.f32 %v920, %v977
    %v992 = vmul.f32 %v921, %v977
    %v993 = vmul.f32 %v922, %v977
    %v994 = vmul.f32 %v923, %v977
    %v995 = vmul.f32 %v924, %v977
    %v996 = vmul.f32 %v925, %v977
    %v997 = vmul.f32 %v926, %v977
    %v998 = vmul.f32 %v927, %v977
    %v999 = vmul.f32 %v928, %v977
    %v1000 = vmul.f32 %v929, %v977
    %v1001 = vmul.f32 %v930, %v977
    %v1002 = vmul.f32 %v931, %v977
    %v1003 = vmul.f32 %v932, %v977
    %v1004 = vmul.f32 %v933, %v977
    %v1005 = vmul.f32 %v934, %v977
    %v1006 = vmul.f32 %v935, %v977
    %v1007 = vmul.f32 %v936, %v977
    %v1008 = vmul.f32 %v937, %v977
    %v1009 = vmul.f32 %v938, %v977
    %v1010 = vmul.f32 %v939, %v977
    %v1011 = vmul.f32 %v940, %v977
    %v1012 = vmul.f32 %v941, %v977
    %v1013 = vmul.f32 %v942, %v977
    %v1014 = vmul.f32 %v943, %v977
    %v1015 = vmul.f32 %v944, %v977
    %v1016 = vmul.f32 %v945, %v977
    %v1017 = vmul.f32 %v946, %v977
    %v1018 = vmul.f32 %v947, %v977
    %v1019 = vmul.f32 %v948, %v977
    %v1020 = vmul.f32 %v949, %v977
    %v1021 = vmul.f32 %v950, %v977
    %v1022 = vmul.f32 %v951, %v977
    %v1023 = vmul.f32 %v952, %v977
    %v1024 = vmul.f32 %v953, %v977
    %v1025 = vmul.f32 %v954, %v977
    %v1026 = vmul.f32 %v955, %v977
    %v1027 = vmul.f32 %v956, %v977
    %v1028 = vmul.f32 %v957, %v977
    %v1029 = vmul.f32 %v958, %v977
    %v1030 = vmul.f32 %v959, %v977
    %v1031 = vmul.f32 %v960, %v977
    %v1032 = vmul.f32 %v961, %v977
    %v1033 = vmul.f32 %v962, %v977
    %v1034 = vmul.f32 %v963, %v977
    %v1035 = vmul.f32 %v964, %v977
    %v1036 = vmul.f32 %v965, %v977
    %v1037 = vmul.f32 %v966, %v977
    %v1038 = vmul.f32 %v967, %v977
    %v1039 = vmul.f32 %v968, %v977
    %v1040 = vmul.f32 %v969, %v977
    %v1041 = vmul.f32 %v970, %v977
    %v1042 = vmul.f32 %v971, %v977
    %v1043 = vld [vmem:[%s3] sm:$0x1]
    %v1045 = vlaneseq
    %v1046 = vshrl.u32 %v1045, 7
    %v1047 = vsub.s32 0, %v1046
    %v1048 = vrot.slane %v1043, %v1047
    %v1050 = vadd.f32 %v979, %v1048
    %v1051 = vadd.f32 %v980, %v1048
    %v1052 = vadd.f32 %v981, %v1048
    %v1053 = vadd.f32 %v982, %v1048
    %v1054 = vadd.f32 %v983, %v1048
    %v1055 = vadd.f32 %v984, %v1048
    %v1056 = vadd.f32 %v985, %v1048
    %v1057 = vadd.f32 %v986, %v1048
    %v1058 = vadd.f32 %v987, %v1048
    %v1059 = vadd.f32 %v988, %v1048
    %v1060 = vadd.f32 %v989, %v1048
    %v1061 = vadd.f32 %v990, %v1048
    %v1062 = vadd.f32 %v991, %v1048
    %v1063 = vadd.f32 %v992, %v1048
    %v1064 = vadd.f32 %v993, %v1048
    %v1065 = vadd.f32 %v994, %v1048
    %v1066 = vadd.f32 %v995, %v1048
    %v1067 = vadd.f32 %v996, %v1048
    %v1068 = vadd.f32 %v997, %v1048
    %v1069 = vadd.f32 %v998, %v1048
    %v1070 = vadd.f32 %v999, %v1048
    %v1071 = vadd.f32 %v1000, %v1048
    %v1072 = vadd.f32 %v1001, %v1048
    %v1073 = vadd.f32 %v1002, %v1048
    %v1074 = vadd.f32 %v1003, %v1048
    %v1075 = vadd.f32 %v1004, %v1048
    %v1076 = vadd.f32 %v1005, %v1048
    %v1077 = vadd.f32 %v1006, %v1048
    %v1078 = vadd.f32 %v1007, %v1048
    %v1079 = vadd.f32 %v1008, %v1048
    %v1080 = vadd.f32 %v1009, %v1048
    %v1081 = vadd.f32 %v1010, %v1048
    %v1082 = vadd.f32 %v1011, %v1048
    %v1083 = vadd.f32 %v1012, %v1048
    %v1084 = vadd.f32 %v1013, %v1048
    %v1085 = vadd.f32 %v1014, %v1048
    %v1086 = vadd.f32 %v1015, %v1048
    %v1087 = vadd.f32 %v1016, %v1048
    %v1088 = vadd.f32 %v1017, %v1048
    %v1089 = vadd.f32 %v1018, %v1048
    %v1090 = vadd.f32 %v1019, %v1048
    %v1091 = vadd.f32 %v1020, %v1048
    %v1092 = vadd.f32 %v1021, %v1048
    %v1093 = vadd.f32 %v1022, %v1048
    %v1094 = vadd.f32 %v1023, %v1048
    %v1095 = vadd.f32 %v1024, %v1048
    %v1096 = vadd.f32 %v1025, %v1048
    %v1097 = vadd.f32 %v1026, %v1048
    %v1098 = vadd.f32 %v1027, %v1048
    %v1099 = vadd.f32 %v1028, %v1048
    %v1100 = vadd.f32 %v1029, %v1048
    %v1101 = vadd.f32 %v1030, %v1048
    %v1102 = vadd.f32 %v1031, %v1048
    %v1103 = vadd.f32 %v1032, %v1048
    %v1104 = vadd.f32 %v1033, %v1048
    %v1105 = vadd.f32 %v1034, %v1048
    %v1106 = vadd.f32 %v1035, %v1048
    %v1107 = vadd.f32 %v1036, %v1048
    %v1108 = vadd.f32 %v1037, %v1048
    %v1109 = vadd.f32 %v1038, %v1048
    %v1110 = vadd.f32 %v1039, %v1048
    %v1111 = vadd.f32 %v1040, %v1048
    %v1112 = vadd.f32 %v1041, %v1048
    %v1113 = vadd.f32 %v1042, %v1048
    %v1114 = vmax.f32 %v1050, 0.0
    %v1115 = vmax.f32 %v1051, 0.0
    %v1116 = vmax.f32 %v1052, 0.0
    %v1117 = vmax.f32 %v1053, 0.0
    %v1118 = vmax.f32 %v1054, 0.0
    %v1119 = vmax.f32 %v1055, 0.0
    %v1120 = vmax.f32 %v1056, 0.0
    %v1121 = vmax.f32 %v1057, 0.0
    %v1122 = vmax.f32 %v1058, 0.0
    %v1123 = vmax.f32 %v1059, 0.0
    %v1124 = vmax.f32 %v1060, 0.0
    %v1125 = vmax.f32 %v1061, 0.0
    %v1126 = vmax.f32 %v1062, 0.0
    %v1127 = vmax.f32 %v1063, 0.0
    %v1128 = vmax.f32 %v1064, 0.0
    %v1129 = vmax.f32 %v1065, 0.0
    %v1130 = vmax.f32 %v1066, 0.0
    %v1131 = vmax.f32 %v1067, 0.0
    %v1132 = vmax.f32 %v1068, 0.0
    %v1133 = vmax.f32 %v1069, 0.0
    %v1134 = vmax.f32 %v1070, 0.0
    %v1135 = vmax.f32 %v1071, 0.0
    %v1136 = vmax.f32 %v1072, 0.0
    %v1137 = vmax.f32 %v1073, 0.0
    %v1138 = vmax.f32 %v1074, 0.0
    %v1139 = vmax.f32 %v1075, 0.0
    %v1140 = vmax.f32 %v1076, 0.0
    %v1141 = vmax.f32 %v1077, 0.0
    %v1142 = vmax.f32 %v1078, 0.0
    %v1143 = vmax.f32 %v1079, 0.0
    %v1144 = vmax.f32 %v1080, 0.0
    %v1145 = vmax.f32 %v1081, 0.0
    %v1146 = vmax.f32 %v1082, 0.0
    %v1147 = vmax.f32 %v1083, 0.0
    %v1148 = vmax.f32 %v1084, 0.0
    %v1149 = vmax.f32 %v1085, 0.0
    %v1150 = vmax.f32 %v1086, 0.0
    %v1151 = vmax.f32 %v1087, 0.0
    %v1152 = vmax.f32 %v1088, 0.0
    %v1153 = vmax.f32 %v1089, 0.0
    %v1154 = vmax.f32 %v1090, 0.0
    %v1155 = vmax.f32 %v1091, 0.0
    %v1156 = vmax.f32 %v1092, 0.0
    %v1157 = vmax.f32 %v1093, 0.0
    %v1158 = vmax.f32 %v1094, 0.0
    %v1159 = vmax.f32 %v1095, 0.0
    %v1160 = vmax.f32 %v1096, 0.0
    %v1161 = vmax.f32 %v1097, 0.0
    %v1162 = vmax.f32 %v1098, 0.0
    %v1163 = vmax.f32 %v1099, 0.0
    %v1164 = vmax.f32 %v1100, 0.0
    %v1165 = vmax.f32 %v1101, 0.0
    %v1166 = vmax.f32 %v1102, 0.0
    %v1167 = vmax.f32 %v1103, 0.0
    %v1168 = vmax.f32 %v1104, 0.0
    %v1169 = vmax.f32 %v1105, 0.0
    %v1170 = vmax.f32 %v1106, 0.0
    %v1171 = vmax.f32 %v1107, 0.0
    %v1172 = vmax.f32 %v1108, 0.0
    %v1173 = vmax.f32 %v1109, 0.0
    %v1174 = vmax.f32 %v1110, 0.0
    %v1175 = vmax.f32 %v1111, 0.0
    %v1176 = vmax.f32 %v1112, 0.0
    %v1177 = vmax.f32 %v1113, 0.0
    %1178 = vst.msk [vmem:[%s4] sm:$0xff] %vm391, %v1114
    %1179 = vst.msk [vmem:[%s4 + $0x8] sm:$0xff] %vm391, %v1115
    %1180 = vst.msk [vmem:[%s4 + $0x10] sm:$0xff] %vm391, %v1116
    %1181 = vst.msk [vmem:[%s4 + $0x18] sm:$0xff] %vm391, %v1117
    %1182 = vst.msk [vmem:[%s4 + $0x20] sm:$0xff] %vm391, %v1118
    %1183 = vst.msk [vmem:[%s4 + $0x28] sm:$0xff] %vm391, %v1119
    %1184 = vst.msk [vmem:[%s4 + $0x30] sm:$0xff] %vm391, %v1120
    %1185 = vst.msk [vmem:[%s4 + $0x38] sm:$0xff] %vm391, %v1121
    %1186 = vst.msk [vmem:[%s4 + $0x40] sm:$0xff] %vm391, %v1122
    %1187 = vst.msk [vmem:[%s4 + $0x48] sm:$0xff] %vm391, %v1123
    %1188 = vst.msk [vmem:[%s4 + $0x50] sm:$0xff] %vm391, %v1124
    %1189 = vst.msk [vmem:[%s4 + $0x58] sm:$0xff] %vm391, %v1125
    %1190 = vst.msk [vmem:[%s4 + $0x60] sm:$0xff] %vm391, %v1126
    %1191 = vst.msk [vmem:[%s4 + $0x68] sm:$0xff] %vm391, %v1127
    %1192 = vst.msk [vmem:[%s4 + $0x70] sm:$0xff] %vm391, %v1128
    %1193 = vst.msk [vmem:[%s4 + $0x78] sm:$0xff] %vm391, %v1129
    %1194 = vst.msk [vmem:[%s4 + $0x80] sm:$0xff] %vm391, %v1130
    %1195 = vst.msk [vmem:[%s4 + $0x88] sm:$0xff] %vm391, %v1131
    %1196 = vst.msk [vmem:[%s4 + $0x90] sm:$0xff] %vm391, %v1132
    %1197 = vst.msk [vmem:[%s4 + $0x98] sm:$0xff] %vm391, %v1133
    %1198 = vst.msk [vmem:[%s4 + $0xa0] sm:$0xff] %vm391, %v1134
    %1199 = vst.msk [vmem:[%s4 + $0xa8] sm:$0xff] %vm391, %v1135
    %1200 = vst.msk [vmem:[%s4 + $0xb0] sm:$0xff] %vm391, %v1136
    %1201 = vst.msk [vmem:[%s4 + $0xb8] sm:$0xff] %vm391, %v1137
    %1202 = vst.msk [vmem:[%s4 + $0xc0] sm:$0xff] %vm391, %v1138
    %1203 = vst.msk [vmem:[%s4 + $0xc8] sm:$0xff] %vm391, %v1139
    %1204 = vst.msk [vmem:[%s4 + $0xd0] sm:$0xff] %vm391, %v1140
    %1205 = vst.msk [vmem:[%s4 + $0xd8] sm:$0xff] %vm391, %v1141
    %1206 = vst.msk [vmem:[%s4 + $0xe0] sm:$0xff] %vm391, %v1142
    %1207 = vst.msk [vmem:[%s4 + $0xe8] sm:$0xff] %vm391, %v1143
    %1208 = vst.msk [vmem:[%s4 + $0xf0] sm:$0xff] %vm391, %v1144
    %1209 = vst.msk [vmem:[%s4 + $0xf8] sm:$0xff] %vm391, %v1145
    %1210 = vst.msk [vmem:[%s4 + $0x100] sm:$0xff] %vm391, %v1146
    %1211 = vst.msk [vmem:[%s4 + $0x108] sm:$0xff] %vm391, %v1147
    %1212 = vst.msk [vmem:[%s4 + $0x110] sm:$0xff] %vm391, %v1148
    %1213 = vst.msk [vmem:[%s4 + $0x118] sm:$0xff] %vm391, %v1149
    %1214 = vst.msk [vmem:[%s4 + $0x120] sm:$0xff] %vm391, %v1150
    %1215 = vst.msk [vmem:[%s4 + $0x128] sm:$0xff] %vm391, %v1151
    %1216 = vst.msk [vmem:[%s4 + $0x130] sm:$0xff] %vm391, %v1152
    %1217 = vst.msk [vmem:[%s4 + $0x138] sm:$0xff] %vm391, %v1153
    %1218 = vst.msk [vmem:[%s4 + $0x140] sm:$0xff] %vm391, %v1154
    %1219 = vst.msk [vmem:[%s4 + $0x148] sm:$0xff] %vm391, %v1155
    %1220 = vst.msk [vmem:[%s4 + $0x150] sm:$0xff] %vm391, %v1156
    %1221 = vst.msk [vmem:[%s4 + $0x158] sm:$0xff] %vm391, %v1157
    %1222 = vst.msk [vmem:[%s4 + $0x160] sm:$0xff] %vm391, %v1158
    %1223 = vst.msk [vmem:[%s4 + $0x168] sm:$0xff] %vm391, %v1159
    %1224 = vst.msk [vmem:[%s4 + $0x170] sm:$0xff] %vm391, %v1160
    %1225 = vst.msk [vmem:[%s4 + $0x178] sm:$0xff] %vm391, %v1161
    %1226 = vst.msk [vmem:[%s4 + $0x180] sm:$0xff] %vm391, %v1162
    %1227 = vst.msk [vmem:[%s4 + $0x188] sm:$0xff] %vm391, %v1163
    %1228 = vst.msk [vmem:[%s4 + $0x190] sm:$0xff] %vm391, %v1164
    %1229 = vst.msk [vmem:[%s4 + $0x198] sm:$0xff] %vm391, %v1165
    %1230 = vst.msk [vmem:[%s4 + $0x1a0] sm:$0xff] %vm391, %v1166
    %1231 = vst.msk [vmem:[%s4 + $0x1a8] sm:$0xff] %vm391, %v1167
    %1232 = vst.msk [vmem:[%s4 + $0x1b0] sm:$0xff] %vm391, %v1168
    %1233 = vst.msk [vmem:[%s4 + $0x1b8] sm:$0xff] %vm391, %v1169
    %1234 = vst.msk [vmem:[%s4 + $0x1c0] sm:$0xff] %vm391, %v1170
    %1235 = vst.msk [vmem:[%s4 + $0x1c8] sm:$0xff] %vm391, %v1171
    %1236 = vst.msk [vmem:[%s4 + $0x1d0] sm:$0xff] %vm391, %v1172
    %1237 = vst.msk [vmem:[%s4 + $0x1d8] sm:$0xff] %vm391, %v1173
    %1238 = vst.msk [vmem:[%s4 + $0x1e0] sm:$0xff] %vm391, %v1174
    %1239 = vst.msk [vmem:[%s4 + $0x1e8] sm:$0xff] %vm391, %v1175
    %1240 = vst.msk [vmem:[%s4 + $0x1f0] sm:$0xff] %vm391, %v1176
    %1241 = vst.msk [vmem:[%s4 + $0x1f8] sm:$0xff] %vm391, %v1177
  $region25: #{tpu_custom_call.1} parent=0 // pred_fallthru
    _
  // Predicated region
  $region26: #{tpu_custom_call.1} parent=0 // pred_check
    _
  $region27: #{tpu_custom_call.1} parent=0 // pred_check_branch
    %1243 = sbr.rel (0) target = $region29
  $region28: #{tpu_custom_call.1} parent=0 // pred_region
    _
  $region29: #{tpu_custom_call.1} parent=0 // pred_fallthru
    _
  // Predicated region
  $region30: #{tpu_custom_call.1} parent=0 // pred_check
    _
  $region31: #{tpu_custom_call.1} parent=0 // pred_check_branch
    %1245 = sbr.rel (0) target = $region33
  $region32: #{tpu_custom_call.1} parent=0 // pred_region
    _
  $region33: #{tpu_custom_call.1} parent=0 // pred_fallthru
    _

</llo_original>
